<compile_context>
chip_gen: v5e
topology: v5e:2x2
jax: 0.10.0
libtpu: 0.0.40
codegen_flags: <defaults>
</compile_context>

<pallas_src>
import math
import numpy as np
import jax
import jax.numpy as jnp
from jax.experimental import pallas as pl
from jax.experimental.pallas import tpu as pltpu


# ----------------------------------------------------------------------------
# Kernel body
# ----------------------------------------------------------------------------
def _make_swin_attention_kernel(num_heads, head_dim, wb, n_tok, channels,
                                bias_per_window, approx_recip):
    H, D, N, C = num_heads, head_dim, n_tok, channels
    M = wb * N
    scale = 1.0 / math.sqrt(D)

    def kernel(x_ref, wqkv_ref, bqkv_ref, wo_ref, bo_ref, bias_ref, o_ref,
               qkv_ref, ctx_ref):
        dt = x_ref.dtype

        # Fused Q/K/V projection: one K=C MXU matmul, f32 accumulation, one bias add.
        qkv = jnp.dot(x_ref[...], wqkv_ref[...],
                      preferred_element_type=jnp.float32) + bqkv_ref[...]
        qkv_ref[...] = qkv.astype(dt).reshape(wb, N, 3 * C)

        # Per-head attention.  Each head's context goes into its static column
        # slot of ctx_ref so the output projection below runs as a SINGLE
        # full-depth (K = C) matmul instead of H matmuls of contraction depth D.
        # TODO(synk): for large head counts (Swin-B/L deeper stages, H >= 16)
        # replace the static unroll with a head grid axis to bound code size.
        for h in range(H):
            q = qkv_ref[:, :, h * D:(h + 1) * D]                   # (WB, N, D)
            k = qkv_ref[:, :, C + h * D:C + (h + 1) * D]
            v = qkv_ref[:, :, 2 * C + h * D:2 * C + (h + 1) * D]

            # Scaled dot-product scores, batched over the windows in this group.
            s = jnp.einsum("wnd,wmd->wnm", q, k,
                           preferred_element_type=jnp.float32) * scale
            if bias_per_window:
                s = s + bias_ref[:, h]                              # (WB, N, N)
            else:
                s = s + bias_ref[h]                                 # (N, N) broadcast

            # Softmax over keys (f32 throughout).
            m = jnp.max(s, axis=-1, keepdims=True)
            p = jnp.exp(s - m)
            p = p * pl.reciprocal(jnp.sum(p, axis=-1, keepdims=True),
                                  approx=approx_recip)

            ctx = jnp.einsum("wnm,wmd->wnd", p.astype(dt), v,
                             preferred_element_type=jnp.float32)    # (WB, N, D)
            ctx_ref[:, :, h * D:(h + 1) * D] = ctx.astype(dt)

        # Output projection: one (M, C) x (C, C) matmul, f32 accumulation + bias.
        out = jnp.dot(ctx_ref[...].reshape(M, C), wo_ref[...],
                      preferred_element_type=jnp.float32) + bo_ref[...]
        o_ref[...] = out.astype(o_ref.dtype)

    return kernel


# ----------------------------------------------------------------------------
# VMEM budgeting / window-batch selection
# ----------------------------------------------------------------------------
def _vmem_capacity_bytes():
    """Physical VMEM capacity; fall back to the smallest current part (v7x 64 MiB)."""
    try:
        info = pltpu.get_tpu_info()
        cap = getattr(info, "vmem_capacity_bytes", None)
        if cap:
            return int(cap)
    except Exception:
        pass
    return 64 * 1024 * 1024


def _step_vmem_bytes(wb, n_tok, channels, num_heads, itemsize, masked,
                     single_buffer_resident=True):
    """Budget-complete per-step VMEM estimate: activation blocks (double-
    buffered by the pipeline), resident weights, the bias block, VMEM scratch,
    and the live f32 intermediates."""
    rows = wb * n_tok
    wbuf = 1 if single_buffer_resident else 2
    total = 0
    total += 2 * rows * channels * itemsize * 2                       # x + out blocks (x2 buffers)
    total += (channels * 3 * channels + 3 * channels) * itemsize * wbuf   # Wqkv + bqkv (resident)
    total += (channels * channels + channels) * itemsize * wbuf           # Wo + bo (resident)
    if masked:
        total += wb * num_heads * n_tok * n_tok * 4 * 2               # folded bias block (f32)
    else:
        total += num_heads * n_tok * n_tok * 4 * wbuf                 # resident rel-pos bias (f32)
    total += rows * 3 * channels * itemsize                           # qkv scratch
    total += rows * channels * itemsize                               # ctx scratch
    total += rows * 3 * channels * 4                                  # f32 qkv slab pre-cast
    total += 3 * wb * n_tok * n_tok * 4                               # scores/probs (one head live)
    total += rows * channels * 4                                      # f32 output slab
    return total


def _pick_window_batch(num_windows, n_tok, channels, num_heads, itemsize,
                       mask_windows, vmem_budget, target_rows=512,
                       min_grid_steps=2):
    """Pick the number of windows processed per grid step.

    Aims for ~target_rows MXU M-rows per step (fills >=2 of the 256-row M tiles
    on v6e/v7x and amortises the ~0.35 us per-step overhead), while:
      * dividing the window count (and mask window count, if present),
      * keeping the (wb*N, C) block sublane-aligned (rows % 8 == 0),
      * fitting the budget-complete per-step VMEM estimate, and
      * keeping at least `min_grid_steps` grid steps so both v7x TensorCores
        get work (v5e/v6e are single-core, an extra step costs little).
    """
    def valid(wb):
        if num_windows % wb:
            return False
        if mask_windows is not None and mask_windows % wb:
            return False
        rows = wb * n_tok
        if rows % 8 and wb != num_windows:
            return False
        return _step_vmem_bytes(wb, n_tok, channels, num_heads, itemsize,
                                mask_windows is not None) <= vmem_budget

    cap = max(1, target_rows // max(1, n_tok))
    cands = [d for d in range(1, num_windows + 1) if valid(d)]
    if not cands:
        return 1
    small = [d for d in cands if d <= cap] or cands
    multi = [d for d in small if num_windows // d >= min_grid_steps]
    return max(multi if multi else small)
    # TODO(synk): relax the divisibility requirement (pad or mask a remainder
    # window group) so awkward window counts with N=49 don't fall back to wb=1.


# ----------------------------------------------------------------------------
# Wrapper
# ----------------------------------------------------------------------------
def swin_attention_forward(hidden_states, params, rel_pos_bias, num_heads,
                           attention_mask=None, window_batch=None,
                           compute_dtype=None, approx_reciprocal=False):
    """hidden_states: (B, N, C); rel_pos_bias: (H, N, N);
    attention_mask: optional (nw, N, N); returns (B, N, C).
    compute_dtype=jnp.bfloat16 enables the production mixed-precision path."""
    B, N, C = hidden_states.shape
    H = num_heads
    assert C % H == 0
    D = C // H
    wq, bq, wk, bk, wv, bv, wo, bo = params

    kdt = jnp.dtype(compute_dtype) if compute_dtype is not None else hidden_states.dtype

    # ---- host-side parameter packing (pure layout, runs once) ----
    w_qkv = jnp.concatenate([wq, wk, wv], axis=1).astype(kdt)            # (C, 3C)
    b_qkv = jnp.concatenate([bq, bk, bv]).reshape(1, 3 * C).astype(jnp.float32)
    wo_k = wo.astype(kdt)                                                # (C, C)
    bo2 = bo.reshape(1, C).astype(jnp.float32)

    if attention_mask is not None:
        nw = attention_mask.shape[0]
        assert B % nw == 0, "window count must be a multiple of the mask window count"
        # Small (nw, H, N, N) folded bias — never broadcast to (B, H, N, N); stays f32.
        bias_all = (rel_pos_bias[None, :, :, :]
                    + attention_mask[:, None, :, :]).astype(jnp.float32)
    else:
        nw = None
        bias_all = rel_pos_bias.astype(jnp.float32)                      # (H, N, N), resident

    vmem_cap = _vmem_capacity_bytes()
    if window_batch is not None:
        wb = window_batch
    else:
        wb = _pick_window_batch(B, N, C, H, jnp.dtype(kdt).itemsize, nw,
                                vmem_budget=int(vmem_cap * 0.45))
    assert B % wb == 0
    if nw is not None:
        assert nw % wb == 0

    x2d = hidden_states.reshape(B * N, C).astype(kdt)
    # TODO(synk): for Swin stages where C is not a multiple of 128 (C=96, 192),
    # pad the channel dim to the next multiple of 128 here (and slice after the
    # call) if profiling shows masked-lane store / DMA inefficiency.

    kernel = _make_swin_attention_kernel(H, D, wb, N, C,
                                         bias_per_window=nw is not None,
                                         approx_recip=approx_reciprocal)

    needed = _step_vmem_bytes(wb, N, C, H, jnp.dtype(kdt).itemsize, nw is not None)
    vmem_limit = int(min(vmem_cap * 0.9, max(needed + (16 << 20), 32 << 20)))

    def build_and_run(single_buffer_resident):
        resident_mode = {}
        if single_buffer_resident:
            # Constant-index blocks gain nothing from double buffering; a single
            # buffer halves their resident VMEM (matters on v7x's 64 MiB VMEM at
            # production channel widths).
            resident_mode = dict(pipeline_mode=pl.Buffered(1))

        if nw is None:
            grid = (B // wb,)
            x_map = lambda g: (g, 0)
            const_map = lambda g: (0, 0)
            bias_spec = pl.BlockSpec((H, N, N), lambda g: (0, 0, 0), **resident_mode)
            dims = ("parallel",)
        else:
            # Bias-block OUTER, image INNER: consecutive steps reuse the same
            # (wb, H, N, N) bias block, so it is DMA'd only nw/wb times total
            # instead of once per grid step.
            nbb = nw // wb
            grid = (nbb, B // nw)
            x_map = lambda i, j: (j * nbb + i, 0)
            const_map = lambda i, j: (0, 0)
            bias_spec = pl.BlockSpec((wb, H, N, N), lambda i, j: (i, 0, 0, 0))
            dims = ("parallel", "parallel")

        in_specs = [
            pl.BlockSpec((wb * N, C), x_map),                       # x rows for this group
            pl.BlockSpec((C, 3 * C), const_map, **resident_mode),   # fused QKV weight (resident)
            pl.BlockSpec((1, 3 * C), const_map, **resident_mode),   # fused QKV bias
            pl.BlockSpec((C, C), const_map, **resident_mode),       # Wo (resident)
            pl.BlockSpec((1, C), const_map, **resident_mode),       # output bias
            bias_spec,                                               # rel-pos (+mask) bias
        ]
        out_specs = pl.BlockSpec((wb * N, C), x_map)

        return pl.pallas_call(
            kernel,
            out_shape=jax.ShapeDtypeStruct((B * N, C), hidden_states.dtype),
            grid_spec=pltpu.PrefetchScalarGridSpec(
                num_scalar_prefetch=0,
                grid=grid,
                in_specs=in_specs,
                out_specs=out_specs,
                scratch_shapes=[pltpu.VMEM((wb, N, 3 * C), kdt),     # staged qkv slab
                                pltpu.VMEM((wb, N, C), kdt)]),       # per-head ctx slots
            compiler_params=pltpu.CompilerParams(
                dimension_semantics=dims,
                vmem_limit_bytes=vmem_limit),
        )(x2d, w_qkv, b_qkv, wo_k, bo2, bias_all)

    try:
        out = build_and_run(single_buffer_resident=True)
    except Exception:
        # Fallback if this runtime rejects pipeline_mode=pl.Buffered(1);
        # identical kernel, default double-buffered resident blocks.
        out = build_and_run(single_buffer_resident=False)

    return out.reshape(B, N, C)


# ----------------------------------------------------------------------------
# Reference + helpers
# ----------------------------------------------------------------------------
def make_relative_position_index(window_size):
    wh, ww = window_size
    coords_h = np.arange(wh)
    coords_w = np.arange(ww)
    coords = np.stack(np.meshgrid(coords_h, coords_w, indexing="ij"))    # (2, wh, ww)
    coords_flatten = coords.reshape(2, -1)                               # (2, N)
    rel = coords_flatten[:, :, None] - coords_flatten[:, None, :]        # (2, N, N)
    rel = rel.transpose(1, 2, 0).astype(np.int64)                        # (N, N, 2)
    rel[:, :, 0] += wh - 1
    rel[:, :, 1] += ww - 1
    rel[:, :, 0] *= 2 * ww - 1
    return rel.sum(-1)                                                   # (N, N)


def reference_swin_attention(x, params, rel_pos_bias, num_heads, attention_mask=None):
    """Pure-JAX reference mirroring the PyTorch module semantics."""
    B, N, C = x.shape
    H = num_heads
    D = C // H
    wq, bq, wk, bk, wv, bv, wo, bo = params
    q = x @ wq + bq
    k = x @ wk + bk
    v = x @ wv + bv

    def split(t):  # (B, N, C) -> (B, H, N, D)
        return t.reshape(B, N, H, D).transpose(0, 2, 1, 3)

    qh, kh, vh = split(q), split(k), split(v)
    scores = jnp.einsum("bhnd,bhmd->bhnm", qh, kh) / math.sqrt(D)
    scores = scores + rel_pos_bias[None]
    if attention_mask is not None:
        nw = attention_mask.shape[0]
        scores = scores.reshape(B // nw, nw, H, N, N)
        scores = scores + attention_mask[None, :, None]
        scores = scores.reshape(B, H, N, N)
    probs = jax.nn.softmax(scores, axis=-1)
    ctx = jnp.einsum("bhnm,bhmd->bhnd", probs, vh)
    ctx = ctx.transpose(0, 2, 1, 3).reshape(B, N, C)
    return ctx @ wo + bo


if __name__ == "__main__":
    # Small, Swin-consistent shapes.
    window_size = (4, 4)
    N = window_size[0] * window_size[1]   # 16 tokens per window
    C = 32                                # channels (all_head_size)
    H = 2                                 # num_attention_heads
    B = 4                                 # num_windows * batch

    key = jax.random.PRNGKey(0)
    keys = jax.random.split(key, 12)

    # Deterministic synthetic parameters (weights stored as (C_in, C_out)).
    scale = 0.05
    wq = jax.random.normal(keys[0], (C, C), jnp.float32) * scale
    bq = jax.random.normal(keys[1], (C,), jnp.float32) * scale
    wk = jax.random.normal(keys[2], (C, C), jnp.float32) * scale
    bk = jax.random.normal(keys[3], (C,), jnp.float32) * scale
    wv = jax.random.normal(keys[4], (C, C), jnp.float32) * scale
    bv = jax.random.normal(keys[5], (C,), jnp.float32) * scale
    wo = jax.random.normal(keys[6], (C, C), jnp.float32) * scale
    bo = jax.random.normal(keys[7], (C,), jnp.float32) * scale
    params = (wq, bq, wk, bk, wv, bv, wo, bo)

    # Relative position bias table + index (module inits table to zeros; use
    # small random values so the bias path is actually exercised).
    table = jax.random.normal(
        keys[8], ((2 * window_size[0] - 1) * (2 * window_size[1] - 1), H),
        jnp.float32) * 0.1
    rel_index = jnp.asarray(make_relative_position_index(window_size))       # (N, N)
    rel_pos_bias = table[rel_index.reshape(-1)].reshape(N, N, H).transpose(2, 0, 1)  # (H, N, N)

    # Input hidden_states (B, N, C).
    x = jax.random.normal(keys[9], (B, N, C), jnp.float32)

    # TODO(synk): output_attentions=True (returning attention_probs) and head_mask
    # are not plumbed out of the fused kernel; only the attention_output path exists.

    # --- no attention mask ---
    out = swin_attention_forward(x, params, rel_pos_bias, H, attention_mask=None)
    out = jax.block_until_ready(out)
    ref = reference_swin_attention(x, params, rel_pos_bias, H, attention_mask=None)
    np.testing.assert_allclose(np.asarray(out), np.asarray(ref), rtol=1e-4, atol=1e-4)

    # --- shifted-window style attention mask (nw windows per image) ---
    nw = 2                                                            # batch = B // nw = 2
    mask = jnp.where(jax.random.uniform(keys[10], (nw, N, N)) < 0.5,
                     0.0, -100.0).astype(jnp.float32)
    out_m = swin_attention_forward(x, params, rel_pos_bias, H, attention_mask=mask)
    out_m = jax.block_until_ready(out_m)
    ref_m = reference_swin_attention(x, params, rel_pos_bias, H, attention_mask=mask)
    np.testing.assert_allclose(np.asarray(out_m), np.asarray(ref_m), rtol=1e-4, atol=1e-4)

    # --- production mixed-precision path (bf16 operands, f32 accumulation/softmax) ---
    out_bf16 = swin_attention_forward(x, params, rel_pos_bias, H,
                                      compute_dtype=jnp.bfloat16,
                                      approx_reciprocal=True)
    out_bf16 = jax.block_until_ready(out_bf16)
    np.testing.assert_allclose(np.asarray(out_bf16), np.asarray(ref), rtol=1e-1, atol=1e-1)

    print("KERNEL_OK")
</pallas_src>

<mosaic_0001>
module attributes {stable_mosaic.version = 11 : i64} {
  func.func @kernel(%arg0: i32, %arg1: memref<32x32xf32, #tpu.memory_space<vmem>>, %arg2: memref<32x96xf32, #tpu.memory_space<vmem>>, %arg3: memref<1x96xf32, #tpu.memory_space<vmem>>, %arg4: memref<32x32xf32, #tpu.memory_space<vmem>>, %arg5: memref<1x32xf32, #tpu.memory_space<vmem>>, %arg6: memref<2x16x16xf32, #tpu.memory_space<vmem>>, %arg7: memref<32x32xf32, #tpu.memory_space<vmem>>, %arg8: memref<2x16x96xf32, #tpu.memory_space<vmem>>, %arg9: memref<2x16x32xf32, #tpu.memory_space<vmem>>) attributes {dimension_semantics = [#tpu.dimension_semantics<parallel>], iteration_bounds = array<i64: 2>, scalar_prefetch = 0 : i64, scratch_operands = 2 : i64, tpu.core_type = #tpu.core_type<tc>, window_params = [{transform_indices = @transform_0, window_bounds = array<i64: 32, 32>}, {pipeline_mode = #tpu.pipeline_mode<synchronous>, transform_indices = @transform_1, window_bounds = array<i64: 32, 96>}, {pipeline_mode = #tpu.pipeline_mode<synchronous>, transform_indices = @transform_2, window_bounds = array<i64: 1, 96>}, {pipeline_mode = #tpu.pipeline_mode<synchronous>, transform_indices = @transform_3, window_bounds = array<i64: 32, 32>}, {pipeline_mode = #tpu.pipeline_mode<synchronous>, transform_indices = @transform_4, window_bounds = array<i64: 1, 32>}, {pipeline_mode = #tpu.pipeline_mode<synchronous>, transform_indices = @transform_5, window_bounds = array<i64: 2, 16, 16>}, {transform_indices = @transform_6, window_bounds = array<i64: 32, 32>}]} {
    %c0 = arith.constant 0 : index
    %c0_0 = arith.constant 0 : index
    %0 = vector.load %arg1[%c0, %c0_0] : memref<32x32xf32, #tpu.memory_space<vmem>>, vector<32x32xf32>
    %c0_1 = arith.constant 0 : index
    %c0_2 = arith.constant 0 : index
    %1 = vector.load %arg2[%c0_1, %c0_2] : memref<32x96xf32, #tpu.memory_space<vmem>>, vector<32x96xf32>
    %cst = arith.constant dense<0.000000e+00> : vector<32x96xf32>
    %2 = tpu.matmul %0, %1, %cst {dimension_numbers = #tpu.dot_dimension_numbers<[1], [0], [0], [1], [0, 0, 1, 1], [], []>} : vector<32x32xf32>, vector<32x96xf32>, vector<32x96xf32> -> vector<32x96xf32>
    %c0_3 = arith.constant 0 : index
    %c0_4 = arith.constant 0 : index
    %3 = vector.load %arg3[%c0_3, %c0_4] : memref<1x96xf32, #tpu.memory_space<vmem>>, vector<1x96xf32>
    %4 = vector.broadcast %3 : vector<1x96xf32> to vector<32x96xf32>
    %5 = arith.addf %2, %4 : vector<32x96xf32>
    %6 = vector.shape_cast %5 : vector<32x96xf32> to vector<2x16x96xf32>
    %c0_5 = arith.constant 0 : index
    %c0_6 = arith.constant 0 : index
    %c0_7 = arith.constant 0 : index
    %7 = vector.load %arg8[%c0_5, %c0_6, %c0_7] : memref<2x16x96xf32, #tpu.memory_space<vmem>>, vector<2x16x96xf32>
    tpu.vector_store %arg8[%c0_5, %c0_6, %c0_7], %6 {strides = array<i32>} : memref<2x16x96xf32, #tpu.memory_space<vmem>>, vector<2x16x96xf32>,
    %c0_8 = arith.constant 0 : index
    %c0_9 = arith.constant 0 : index
    %c0_10 = arith.constant 0 : index
    %8 = vector.load %arg8[%c0_8, %c0_9, %c0_10] : memref<2x16x96xf32, #tpu.memory_space<vmem>>, vector<2x16x16xf32>
    %c0_11 = arith.constant 0 : index
    %c0_12 = arith.constant 0 : index
    %c32 = arith.constant 32 : index
    %9 = vector.load %arg8[%c0_11, %c0_12, %c32] : memref<2x16x96xf32, #tpu.memory_space<vmem>>, vector<2x16x16xf32>
    %c0_13 = arith.constant 0 : index
    %c0_14 = arith.constant 0 : index
    %c64 = arith.constant 64 : index
    %10 = vector.load %arg8[%c0_13, %c0_14, %c64] : memref<2x16x96xf32, #tpu.memory_space<vmem>>, vector<2x16x16xf32>
    "tpu.trace_start"() <{level = 10 : i32, message = "wnd,wmd->wnm"}> : () -> ()
    %cst_15 = arith.constant dense<0.000000e+00> : vector<2x16x16xf32>
    %11 = tpu.matmul %8, %9, %cst_15 {dimension_numbers = #tpu.dot_dimension_numbers<[2], [2], [1], [1], [0, 0, 0, 1, 1, 1], [0], [0]>} : vector<2x16x16xf32>, vector<2x16x16xf32>, vector<2x16x16xf32> -> vector<2x16x16xf32>
    "tpu.trace_stop"() : () -> ()
    %cst_16 = arith.constant 2.500000e-01 : f32
    %12 = vector.broadcast %cst_16 : f32 to vector<2x16x16xf32>
    %13 = arith.mulf %11, %12 : vector<2x16x16xf32>
    %c0_17 = arith.constant 0 : index
    %c0_18 = arith.constant 0 : index
    %c0_19 = arith.constant 0 : index
    %14 = vector.load %arg6[%c0_17, %c0_18, %c0_19] : memref<2x16x16xf32, #tpu.memory_space<vmem>>, vector<1x16x16xf32>
    %15 = vector.shape_cast %14 : vector<1x16x16xf32> to vector<16x16xf32>
    %16 = vector.shape_cast %15 : vector<16x16xf32> to vector<1x16x16xf32>
    %17 = vector.broadcast %16 : vector<1x16x16xf32> to vector<2x16x16xf32>
    %18 = arith.addf %13, %17 : vector<2x16x16xf32>
    %cst_20 = arith.constant dense<0xFF800000> : vector<2x16xf32>
    %19 = vector.multi_reduction <maximumf>, %18, %cst_20 [2] : vector<2x16x16xf32> to vector<2x16xf32>
    %20 = vector.shape_cast %19 : vector<2x16xf32> to vector<2x16x1xf32>
    %21 = vector.broadcast %20 : vector<2x16x1xf32> to vector<2x16x16xf32>
    %22 = arith.subf %18, %21 : vector<2x16x16xf32>
    %23 = math.exp %22 : vector<2x16x16xf32>
    %cst_21 = arith.constant dense<0.000000e+00> : vector<2x16xf32>
    %24 = vector.multi_reduction <add>, %23, %cst_21 [2] : vector<2x16x16xf32> to vector<2x16xf32>
    %25 = vector.shape_cast %24 : vector<2x16xf32> to vector<2x16x1xf32>
    %26 = tpu.reciprocal %25 : vector<2x16x1xf32> -> vector<2x16x1xf32>
    %27 = vector.broadcast %26 : vector<2x16x1xf32> to vector<2x16x16xf32>
    %28 = arith.mulf %23, %27 : vector<2x16x16xf32>
    "tpu.trace_start"() <{level = 10 : i32, message = "wnm,wmd->wnd"}> : () -> ()
    %cst_22 = arith.constant dense<0.000000e+00> : vector<2x16x16xf32>
    %29 = tpu.matmul %28, %10, %cst_22 {dimension_numbers = #tpu.dot_dimension_numbers<[2], [1], [1], [2], [0, 0, 0, 1, 1, 2], [0], [0]>} : vector<2x16x16xf32>, vector<2x16x16xf32>, vector<2x16x16xf32> -> vector<2x16x16xf32>
    "tpu.trace_stop"() : () -> ()
    %c0_23 = arith.constant 0 : index
    %c0_24 = arith.constant 0 : index
    %c0_25 = arith.constant 0 : index
    %30 = vector.load %arg9[%c0_23, %c0_24, %c0_25] : memref<2x16x32xf32, #tpu.memory_space<vmem>>, vector<2x16x16xf32>
    tpu.vector_store %arg9[%c0_23, %c0_24, %c0_25], %29 {strides = array<i32>} : memref<2x16x32xf32, #tpu.memory_space<vmem>>, vector<2x16x16xf32>,
    %c0_26 = arith.constant 0 : index
    %c0_27 = arith.constant 0 : index
    %c16 = arith.constant 16 : index
    %31 = vector.load %arg8[%c0_26, %c0_27, %c16] : memref<2x16x96xf32, #tpu.memory_space<vmem>>, vector<2x16x16xf32>
    %c0_28 = arith.constant 0 : index
    %c0_29 = arith.constant 0 : index
    %c48 = arith.constant 48 : index
    %32 = vector.load %arg8[%c0_28, %c0_29, %c48] : memref<2x16x96xf32, #tpu.memory_space<vmem>>, vector<2x16x16xf32>
    %c0_30 = arith.constant 0 : index
    %c0_31 = arith.constant 0 : index
    %c80 = arith.constant 80 : index
    %33 = vector.load %arg8[%c0_30, %c0_31, %c80] : memref<2x16x96xf32, #tpu.memory_space<vmem>>, vector<2x16x16xf32>
    "tpu.trace_start"() <{level = 10 : i32, message = "wnd,wmd->wnm"}> : () -> ()
    %cst_32 = arith.constant dense<0.000000e+00> : vector<2x16x16xf32>
    %34 = tpu.matmul %31, %32, %cst_32 {dimension_numbers = #tpu.dot_dimension_numbers<[2], [2], [1], [1], [0, 0, 0, 1, 1, 1], [0], [0]>} : vector<2x16x16xf32>, vector<2x16x16xf32>, vector<2x16x16xf32> -> vector<2x16x16xf32>
    "tpu.trace_stop"() : () -> ()
    %cst_33 = arith.constant 2.500000e-01 : f32
    %35 = vector.broadcast %cst_33 : f32 to vector<2x16x16xf32>
    %36 = arith.mulf %34, %35 : vector<2x16x16xf32>
    %c1 = arith.constant 1 : index
    %c0_34 = arith.constant 0 : index
    %c0_35 = arith.constant 0 : index
    %37 = vector.load %arg6[%c1, %c0_34, %c0_35] : memref<2x16x16xf32, #tpu.memory_space<vmem>>, vector<1x16x16xf32>
    %38 = vector.shape_cast %37 : vector<1x16x16xf32> to vector<16x16xf32>
    %39 = vector.shape_cast %38 : vector<16x16xf32> to vector<1x16x16xf32>
    %40 = vector.broadcast %39 : vector<1x16x16xf32> to vector<2x16x16xf32>
    %41 = arith.addf %36, %40 : vector<2x16x16xf32>
    %cst_36 = arith.constant dense<0xFF800000> : vector<2x16xf32>
    %42 = vector.multi_reduction <maximumf>, %41, %cst_36 [2] : vector<2x16x16xf32> to vector<2x16xf32>
    %43 = vector.shape_cast %42 : vector<2x16xf32> to vector<2x16x1xf32>
    %44 = vector.broadcast %43 : vector<2x16x1xf32> to vector<2x16x16xf32>
    %45 = arith.subf %41, %44 : vector<2x16x16xf32>
    %46 = math.exp %45 : vector<2x16x16xf32>
    %cst_37 = arith.constant dense<0.000000e+00> : vector<2x16xf32>
    %47 = vector.multi_reduction <add>, %46, %cst_37 [2] : vector<2x16x16xf32> to vector<2x16xf32>
    %48 = vector.shape_cast %47 : vector<2x16xf32> to vector<2x16x1xf32>
    %49 = tpu.reciprocal %48 : vector<2x16x1xf32> -> vector<2x16x1xf32>
    %50 = vector.broadcast %49 : vector<2x16x1xf32> to vector<2x16x16xf32>
    %51 = arith.mulf %46, %50 : vector<2x16x16xf32>
    "tpu.trace_start"() <{level = 10 : i32, message = "wnm,wmd->wnd"}> : () -> ()
    %cst_38 = arith.constant dense<0.000000e+00> : vector<2x16x16xf32>
    %52 = tpu.matmul %51, %33, %cst_38 {dimension_numbers = #tpu.dot_dimension_numbers<[2], [1], [1], [2], [0, 0, 0, 1, 1, 2], [0], [0]>} : vector<2x16x16xf32>, vector<2x16x16xf32>, vector<2x16x16xf32> -> vector<2x16x16xf32>
    "tpu.trace_stop"() : () -> ()
    %c0_39 = arith.constant 0 : index
    %c0_40 = arith.constant 0 : index
    %c16_41 = arith.constant 16 : index
    %53 = vector.load %arg9[%c0_39, %c0_40, %c16_41] : memref<2x16x32xf32, #tpu.memory_space<vmem>>, vector<2x16x16xf32>
    tpu.vector_store %arg9[%c0_39, %c0_40, %c16_41], %52 {strides = array<i32>} : memref<2x16x32xf32, #tpu.memory_space<vmem>>, vector<2x16x16xf32>,
    %c0_42 = arith.constant 0 : index
    %c0_43 = arith.constant 0 : index
    %c0_44 = arith.constant 0 : index
    %54 = vector.load %arg9[%c0_42, %c0_43, %c0_44] : memref<2x16x32xf32, #tpu.memory_space<vmem>>, vector<2x16x32xf32>
    %55 = vector.shape_cast %54 : vector<2x16x32xf32> to vector<32x32xf32>
    %c0_45 = arith.constant 0 : index
    %c0_46 = arith.constant 0 : index
    %56 = vector.load %arg4[%c0_45, %c0_46] : memref<32x32xf32, #tpu.memory_space<vmem>>, vector<32x32xf32>
    %cst_47 = arith.constant dense<0.000000e+00> : vector<32x32xf32>
    %57 = tpu.matmul %55, %56, %cst_47 {dimension_numbers = #tpu.dot_dimension_numbers<[1], [0], [0], [1], [0, 0, 1, 1], [], []>} : vector<32x32xf32>, vector<32x32xf32>, vector<32x32xf32> -> vector<32x32xf32>
    %c0_48 = arith.constant 0 : index
    %c0_49 = arith.constant 0 : index
    %58 = vector.load %arg5[%c0_48, %c0_49] : memref<1x32xf32, #tpu.memory_space<vmem>>, vector<1x32xf32>
    %59 = vector.broadcast %58 : vector<1x32xf32> to vector<32x32xf32>
    %60 = arith.addf %57, %59 : vector<32x32xf32>
    %c0_50 = arith.constant 0 : index
    %c0_51 = arith.constant 0 : index
    %61 = vector.load %arg7[%c0_50, %c0_51] : memref<32x32xf32, #tpu.memory_space<vmem>>, vector<32x32xf32>
    tpu.vector_store %arg7[%c0_50, %c0_51], %60 {strides = array<i32>} : memref<32x32xf32, #tpu.memory_space<vmem>>, vector<32x32xf32>,
    return
  }
  func.func @transform_0(%arg0: i32) -> (i32, i32) {
    %c0_i32 = arith.constant 0 : i32
    %c0_i32_0 = arith.constant 0 : i32
    return %arg0, %c0_i32 : i32, i32
  }
  func.func @transform_1(%arg0: i32) -> (i32, i32) {
    %c0_i32 = arith.constant 0 : i32
    %c0_i32_0 = arith.constant 0 : i32
    %c0_i32_1 = arith.constant 0 : i32
    return %c0_i32, %c0_i32_0 : i32, i32
  }
  func.func @transform_2(%arg0: i32) -> (i32, i32) {
    %c0_i32 = arith.constant 0 : i32
    %c0_i32_0 = arith.constant 0 : i32
    %c0_i32_1 = arith.constant 0 : i32
    return %c0_i32, %c0_i32_0 : i32, i32
  }
  func.func @transform_3(%arg0: i32) -> (i32, i32) {
    %c0_i32 = arith.constant 0 : i32
    %c0_i32_0 = arith.constant 0 : i32
    %c0_i32_1 = arith.constant 0 : i32
    return %c0_i32, %c0_i32_0 : i32, i32
  }
  func.func @transform_4(%arg0: i32) -> (i32, i32) {
    %c0_i32 = arith.constant 0 : i32
    %c0_i32_0 = arith.constant 0 : i32
    %c0_i32_1 = arith.constant 0 : i32
    return %c0_i32, %c0_i32_0 : i32, i32
  }
  func.func @transform_5(%arg0: i32) -> (i32, i32, i32) {
    %c0_i32 = arith.constant 0 : i32
    %c0_i32_0 = arith.constant 0 : i32
    %c0_i32_1 = arith.constant 0 : i32
    %c0_i32_2 = arith.constant 0 : i32
    return %c0_i32, %c0_i32_0, %c0_i32_1 : i32, i32, i32
  }
  func.func @transform_6(%arg0: i32) -> (i32, i32) {
    %c0_i32 = arith.constant 0 : i32
    %c0_i32_0 = arith.constant 0 : i32
    return %arg0, %c0_i32 : i32, i32
  }
}

module attributes {stable_mosaic.version = 11 : i64} {
  func.func @kernel(%arg0: i32, %arg1: memref<32x32xf32, #tpu.memory_space<vmem>>, %arg2: memref<32x96xf32, #tpu.memory_space<vmem>>, %arg3: memref<1x96xf32, #tpu.memory_space<vmem>>, %arg4: memref<32x32xf32, #tpu.memory_space<vmem>>, %arg5: memref<1x32xf32, #tpu.memory_space<vmem>>, %arg6: memref<2x16x16xf32, #tpu.memory_space<vmem>>, %arg7: memref<32x32xf32, #tpu.memory_space<vmem>>, %arg8: memref<2x16x96xf32, #tpu.memory_space<vmem>>, %arg9: memref<2x16x32xf32, #tpu.memory_space<vmem>>) attributes {dimension_semantics = [#tpu.dimension_semantics<parallel>], iteration_bounds = array<i64: 2>, scalar_prefetch = 0 : i64, scratch_operands = 2 : i64, tpu.core_type = #tpu.core_type<tc>, window_params = [{transform_indices = @transform_0, window_bounds = array<i64: 32, 32>}, {pipeline_mode = #tpu.pipeline_mode<synchronous>, transform_indices = @transform_1, window_bounds = array<i64: 32, 96>}, {pipeline_mode = #tpu.pipeline_mode<synchronous>, transform_indices = @transform_2, window_bounds = array<i64: 1, 96>}, {pipeline_mode = #tpu.pipeline_mode<synchronous>, transform_indices = @transform_3, window_bounds = array<i64: 32, 32>}, {pipeline_mode = #tpu.pipeline_mode<synchronous>, transform_indices = @transform_4, window_bounds = array<i64: 1, 32>}, {pipeline_mode = #tpu.pipeline_mode<synchronous>, transform_indices = @transform_5, window_bounds = array<i64: 2, 16, 16>}, {transform_indices = @transform_6, window_bounds = array<i64: 32, 32>}]} {
    %c0 = arith.constant 0 : index
    %c0_0 = arith.constant 0 : index
    %0 = vector.load %arg1[%c0, %c0_0] : memref<32x32xf32, #tpu.memory_space<vmem>>, vector<32x32xf32>
    %c0_1 = arith.constant 0 : index
    %c0_2 = arith.constant 0 : index
    %1 = vector.load %arg2[%c0_1, %c0_2] : memref<32x96xf32, #tpu.memory_space<vmem>>, vector<32x96xf32>
    %cst = arith.constant dense<0.000000e+00> : vector<32x96xf32>
    %2 = tpu.matmul %0, %1, %cst {dimension_numbers = #tpu.dot_dimension_numbers<[1], [0], [0], [1], [0, 0, 1, 1], [], []>} : vector<32x32xf32>, vector<32x96xf32>, vector<32x96xf32> -> vector<32x96xf32>
    %c0_3 = arith.constant 0 : index
    %c0_4 = arith.constant 0 : index
    %3 = vector.load %arg3[%c0_3, %c0_4] : memref<1x96xf32, #tpu.memory_space<vmem>>, vector<1x96xf32>
    %4 = vector.broadcast %3 : vector<1x96xf32> to vector<32x96xf32>
    %5 = arith.addf %2, %4 : vector<32x96xf32>
    %6 = vector.shape_cast %5 : vector<32x96xf32> to vector<2x16x96xf32>
    %c0_5 = arith.constant 0 : index
    %c0_6 = arith.constant 0 : index
    %c0_7 = arith.constant 0 : index
    %7 = vector.load %arg8[%c0_5, %c0_6, %c0_7] : memref<2x16x96xf32, #tpu.memory_space<vmem>>, vector<2x16x96xf32>
    tpu.vector_store %arg8[%c0_5, %c0_6, %c0_7], %6 {strides = array<i32>} : memref<2x16x96xf32, #tpu.memory_space<vmem>>, vector<2x16x96xf32>,
    %c0_8 = arith.constant 0 : index
    %c0_9 = arith.constant 0 : index
    %c0_10 = arith.constant 0 : index
    %8 = vector.load %arg8[%c0_8, %c0_9, %c0_10] : memref<2x16x96xf32, #tpu.memory_space<vmem>>, vector<2x16x16xf32>
    %c0_11 = arith.constant 0 : index
    %c0_12 = arith.constant 0 : index
    %c32 = arith.constant 32 : index
    %9 = vector.load %arg8[%c0_11, %c0_12, %c32] : memref<2x16x96xf32, #tpu.memory_space<vmem>>, vector<2x16x16xf32>
    %c0_13 = arith.constant 0 : index
    %c0_14 = arith.constant 0 : index
    %c64 = arith.constant 64 : index
    %10 = vector.load %arg8[%c0_13, %c0_14, %c64] : memref<2x16x96xf32, #tpu.memory_space<vmem>>, vector<2x16x16xf32>
    "tpu.trace_start"() <{level = 10 : i32, message = "wnd,wmd->wnm"}> : () -> ()
    %cst_15 = arith.constant dense<0.000000e+00> : vector<2x16x16xf32>
    %11 = tpu.matmul %8, %9, %cst_15 {dimension_numbers = #tpu.dot_dimension_numbers<[2], [2], [1], [1], [0, 0, 0, 1, 1, 1], [0], [0]>} : vector<2x16x16xf32>, vector<2x16x16xf32>, vector<2x16x16xf32> -> vector<2x16x16xf32>
    "tpu.trace_stop"() : () -> ()
    %cst_16 = arith.constant 2.500000e-01 : f32
    %12 = vector.broadcast %cst_16 : f32 to vector<2x16x16xf32>
    %13 = arith.mulf %11, %12 : vector<2x16x16xf32>
    %c0_17 = arith.constant 0 : index
    %c0_18 = arith.constant 0 : index
    %c0_19 = arith.constant 0 : index
    %14 = vector.load %arg6[%c0_17, %c0_18, %c0_19] : memref<2x16x16xf32, #tpu.memory_space<vmem>>, vector<1x16x16xf32>
    %15 = vector.shape_cast %14 : vector<1x16x16xf32> to vector<16x16xf32>
    %16 = vector.shape_cast %15 : vector<16x16xf32> to vector<1x16x16xf32>
    %17 = vector.broadcast %16 : vector<1x16x16xf32> to vector<2x16x16xf32>
    %18 = arith.addf %13, %17 : vector<2x16x16xf32>
    %cst_20 = arith.constant dense<0xFF800000> : vector<2x16xf32>
    %19 = vector.multi_reduction <maximumf>, %18, %cst_20 [2] : vector<2x16x16xf32> to vector<2x16xf32>
    %20 = vector.shape_cast %19 : vector<2x16xf32> to vector<2x16x1xf32>
    %21 = vector.broadcast %20 : vector<2x16x1xf32> to vector<2x16x16xf32>
    %22 = arith.subf %18, %21 : vector<2x16x16xf32>
    %23 = math.exp %22 : vector<2x16x16xf32>
    %cst_21 = arith.constant dense<0.000000e+00> : vector<2x16xf32>
    %24 = vector.multi_reduction <add>, %23, %cst_21 [2] : vector<2x16x16xf32> to vector<2x16xf32>
    %25 = vector.shape_cast %24 : vector<2x16xf32> to vector<2x16x1xf32>
    %26 = tpu.reciprocal %25 : vector<2x16x1xf32> -> vector<2x16x1xf32>
    %27 = vector.broadcast %26 : vector<2x16x1xf32> to vector<2x16x16xf32>
    %28 = arith.mulf %23, %27 : vector<2x16x16xf32>
    "tpu.trace_start"() <{level = 10 : i32, message = "wnm,wmd->wnd"}> : () -> ()
    %cst_22 = arith.constant dense<0.000000e+00> : vector<2x16x16xf32>
    %29 = tpu.matmul %28, %10, %cst_22 {dimension_numbers = #tpu.dot_dimension_numbers<[2], [1], [1], [2], [0, 0, 0, 1, 1, 2], [0], [0]>} : vector<2x16x16xf32>, vector<2x16x16xf32>, vector<2x16x16xf32> -> vector<2x16x16xf32>
    "tpu.trace_stop"() : () -> ()
    %c0_23 = arith.constant 0 : index
    %c0_24 = arith.constant 0 : index
    %c0_25 = arith.constant 0 : index
    %30 = vector.load %arg9[%c0_23, %c0_24, %c0_25] : memref<2x16x32xf32, #tpu.memory_space<vmem>>, vector<2x16x16xf32>
    tpu.vector_store %arg9[%c0_23, %c0_24, %c0_25], %29 {strides = array<i32>} : memref<2x16x32xf32, #tpu.memory_space<vmem>>, vector<2x16x16xf32>,
    %c0_26 = arith.constant 0 : index
    %c0_27 = arith.constant 0 : index
    %c16 = arith.constant 16 : index
    %31 = vector.load %arg8[%c0_26, %c0_27, %c16] : memref<2x16x96xf32, #tpu.memory_space<vmem>>, vector<2x16x16xf32>
    %c0_28 = arith.constant 0 : index
    %c0_29 = arith.constant 0 : index
    %c48 = arith.constant 48 : index
    %32 = vector.load %arg8[%c0_28, %c0_29, %c48] : memref<2x16x96xf32, #tpu.memory_space<vmem>>, vector<2x16x16xf32>
    %c0_30 = arith.constant 0 : index
    %c0_31 = arith.constant 0 : index
    %c80 = arith.constant 80 : index
    %33 = vector.load %arg8[%c0_30, %c0_31, %c80] : memref<2x16x96xf32, #tpu.memory_space<vmem>>, vector<2x16x16xf32>
    "tpu.trace_start"() <{level = 10 : i32, message = "wnd,wmd->wnm"}> : () -> ()
    %cst_32 = arith.constant dense<0.000000e+00> : vector<2x16x16xf32>
    %34 = tpu.matmul %31, %32, %cst_32 {dimension_numbers = #tpu.dot_dimension_numbers<[2], [2], [1], [1], [0, 0, 0, 1, 1, 1], [0], [0]>} : vector<2x16x16xf32>, vector<2x16x16xf32>, vector<2x16x16xf32> -> vector<2x16x16xf32>
    "tpu.trace_stop"() : () -> ()
    %cst_33 = arith.constant 2.500000e-01 : f32
    %35 = vector.broadcast %cst_33 : f32 to vector<2x16x16xf32>
    %36 = arith.mulf %34, %35 : vector<2x16x16xf32>
    %c1 = arith.constant 1 : index
    %c0_34 = arith.constant 0 : index
    %c0_35 = arith.constant 0 : index
    %37 = vector.load %arg6[%c1, %c0_34, %c0_35] : memref<2x16x16xf32, #tpu.memory_space<vmem>>, vector<1x16x16xf32>
    %38 = vector.shape_cast %37 : vector<1x16x16xf32> to vector<16x16xf32>
    %39 = vector.shape_cast %38 : vector<16x16xf32> to vector<1x16x16xf32>
    %40 = vector.broadcast %39 : vector<1x16x16xf32> to vector<2x16x16xf32>
    %41 = arith.addf %36, %40 : vector<2x16x16xf32>
    %cst_36 = arith.constant dense<0xFF800000> : vector<2x16xf32>
    %42 = vector.multi_reduction <maximumf>, %41, %cst_36 [2] : vector<2x16x16xf32> to vector<2x16xf32>
    %43 = vector.shape_cast %42 : vector<2x16xf32> to vector<2x16x1xf32>
    %44 = vector.broadcast %43 : vector<2x16x1xf32> to vector<2x16x16xf32>
    %45 = arith.subf %41, %44 : vector<2x16x16xf32>
    %46 = math.exp %45 : vector<2x16x16xf32>
    %cst_37 = arith.constant dense<0.000000e+00> : vector<2x16xf32>
    %47 = vector.multi_reduction <add>, %46, %cst_37 [2] : vector<2x16x16xf32> to vector<2x16xf32>
    %48 = vector.shape_cast %47 : vector<2x16xf32> to vector<2x16x1xf32>
    %49 = tpu.reciprocal %48 : vector<2x16x1xf32> -> vector<2x16x1xf32>
    %50 = vector.broadcast %49 : vector<2x16x1xf32> to vector<2x16x16xf32>
    %51 = arith.mulf %46, %50 : vector<2x16x16xf32>
    "tpu.trace_start"() <{level = 10 : i32, message = "wnm,wmd->wnd"}> : () -> ()
    %cst_38 = arith.constant dense<0.000000e+00> : vector<2x16x16xf32>
    %52 = tpu.matmul %51, %33, %cst_38 {dimension_numbers = #tpu.dot_dimension_numbers<[2], [1], [1], [2], [0, 0, 0, 1, 1, 2], [0], [0]>} : vector<2x16x16xf32>, vector<2x16x16xf32>, vector<2x16x16xf32> -> vector<2x16x16xf32>
    "tpu.trace_stop"() : () -> ()
    %c0_39 = arith.constant 0 : index
    %c0_40 = arith.constant 0 : index
    %c16_41 = arith.constant 16 : index
    %53 = vector.load %arg9[%c0_39, %c0_40, %c16_41] : memref<2x16x32xf32, #tpu.memory_space<vmem>>, vector<2x16x16xf32>
    tpu.vector_store %arg9[%c0_39, %c0_40, %c16_41], %52 {strides = array<i32>} : memref<2x16x32xf32, #tpu.memory_space<vmem>>, vector<2x16x16xf32>,
    %c0_42 = arith.constant 0 : index
    %c0_43 = arith.constant 0 : index
    %c0_44 = arith.constant 0 : index
    %54 = vector.load %arg9[%c0_42, %c0_43, %c0_44] : memref<2x16x32xf32, #tpu.memory_space<vmem>>, vector<2x16x32xf32>
    %55 = vector.shape_cast %54 : vector<2x16x32xf32> to vector<32x32xf32>
    %c0_45 = arith.constant 0 : index
    %c0_46 = arith.constant 0 : index
    %56 = vector.load %arg4[%c0_45, %c0_46] : memref<32x32xf32, #tpu.memory_space<vmem>>, vector<32x32xf32>
    %cst_47 = arith.constant dense<0.000000e+00> : vector<32x32xf32>
    %57 = tpu.matmul %55, %56, %cst_47 {dimension_numbers = #tpu.dot_dimension_numbers<[1], [0], [0], [1], [0, 0, 1, 1], [], []>} : vector<32x32xf32>, vector<32x32xf32>, vector<32x32xf32> -> vector<32x32xf32>
    %c0_48 = arith.constant 0 : index
    %c0_49 = arith.constant 0 : index
    %58 = vector.load %arg5[%c0_48, %c0_49] : memref<1x32xf32, #tpu.memory_space<vmem>>, vector<1x32xf32>
    %59 = vector.broadcast %58 : vector<1x32xf32> to vector<32x32xf32>
    %60 = arith.addf %57, %59 : vector<32x32xf32>
    %c0_50 = arith.constant 0 : index
    %c0_51 = arith.constant 0 : index
    %61 = vector.load %arg7[%c0_50, %c0_51] : memref<32x32xf32, #tpu.memory_space<vmem>>, vector<32x32xf32>
    tpu.vector_store %arg7[%c0_50, %c0_51], %60 {strides = array<i32>} : memref<32x32xf32, #tpu.memory_space<vmem>>, vector<32x32xf32>,
    return
  }
  func.func @transform_0(%arg0: i32) -> (i32, i32) {
    %c0_i32 = arith.constant 0 : i32
    %c0_i32_0 = arith.constant 0 : i32
    return %arg0, %c0_i32 : i32, i32
  }
  func.func @transform_1(%arg0: i32) -> (i32, i32) {
    %c0_i32 = arith.constant 0 : i32
    %c0_i32_0 = arith.constant 0 : i32
    %c0_i32_1 = arith.constant 0 : i32
    return %c0_i32, %c0_i32_0 : i32, i32
  }
  func.func @transform_2(%arg0: i32) -> (i32, i32) {
    %c0_i32 = arith.constant 0 : i32
    %c0_i32_0 = arith.constant 0 : i32
    %c0_i32_1 = arith.constant 0 : i32
    return %c0_i32, %c0_i32_0 : i32, i32
  }
  func.func @transform_3(%arg0: i32) -> (i32, i32) {
    %c0_i32 = arith.constant 0 : i32
    %c0_i32_0 = arith.constant 0 : i32
    %c0_i32_1 = arith.constant 0 : i32
    return %c0_i32, %c0_i32_0 : i32, i32
  }
  func.func @transform_4(%arg0: i32) -> (i32, i32) {
    %c0_i32 = arith.constant 0 : i32
    %c0_i32_0 = arith.constant 0 : i32
    %c0_i32_1 = arith.constant 0 : i32
    return %c0_i32, %c0_i32_0 : i32, i32
  }
  func.func @transform_5(%arg0: i32) -> (i32, i32, i32) {
    %c0_i32 = arith.constant 0 : i32
    %c0_i32_0 = arith.constant 0 : i32
    %c0_i32_1 = arith.constant 0 : i32
    %c0_i32_2 = arith.constant 0 : i32
    return %c0_i32, %c0_i32_0, %c0_i32_1 : i32, i32, i32
  }
  func.func @transform_6(%arg0: i32) -> (i32, i32) {
    %c0_i32 = arith.constant 0 : i32
    %c0_i32_0 = arith.constant 0 : i32
    return %arg0, %c0_i32 : i32, i32
  }
}

</mosaic_0001>

<llo_original>
// kernel: tpu_custom_call.1
$region0: #{tpu_custom_call.1}
  #allocation0 [shape = 'u32[]', space=smem, size = 0x4, offset = 0x4, fixed_abs, tag = 'smem constant byte address 0x4 - core index']
  #allocation1 [shape = 'u32[72,128]{1,0:T(1,128)}', space=vmem, size = 0x9000, scoped, tag = 'internal scratch']
  #allocation2 [shape = 'f32[2,16,96]{2,1,0:T(8,128)}', space=vmem, size = 0x4000, scoped, tag = 'scratch operand']
  #allocation3 [shape = 'f32[2,16,32]{2,1,0:T(8,128)}', space=vmem, size = 0x4000, scoped, tag = 'scratch operand']
  %s0 = inlined_call_operand.vmem [shape: f32[64,32], index: 0, kind: input, shape index: {}]
  %s1 = inlined_call_operand.vmem [shape: f32[32,96], index: 1, kind: input, shape index: {}]
  %s2 = inlined_call_operand.vmem [shape: f32[1,96], index: 2, kind: input, shape index: {}]
  %s3 = inlined_call_operand.vmem [shape: f32[32,32], index: 3, kind: input, shape index: {}]
  %s4 = inlined_call_operand.vmem [shape: f32[1,32], index: 4, kind: input, shape index: {}]
  %s5 = inlined_call_operand.vmem [shape: f32[2,16,16], index: 5, kind: input, shape index: {}]
  %s6 = inlined_call_operand.vmem [shape: f32[64,32], index: 6, kind: output, shape index: {}]
  %s7 = sld [smem:[#allocation0]]
  $region57: #{tpu_custom_call.1} parent=0
    _
  %s9 = ssub.s32 1, %s7
  %s10 = scalar_select 0, %s9, %s7
  loop: start=0, step=1, limit=4
  $region2: #{tpu_custom_call.1} parent=0 // loop_pre_header
    _
  $region3: #{tpu_custom_call.1} parent=0 // loop_header
    %s12 = sphi 0, %s16
    %p13 = scmp.ge.s32.totalorder %s12, 4
    %s22 = sphi 0, %s24
    %s25 = sphi 0, %s22
    %s26 = sphi 0, %s25
    %s42 = sphi 0, %s26
    %s46 = sphi 0, %s46
    %s48 = sphi 0, %s46
    %s49 = sphi 0, %s48
    %s63 = sphi 0, %s49
    %s67 = sphi 0, %s67
    %s69 = sphi 0, %s67
    %s70 = sphi 0, %s69
    %s84 = sphi 0, %s70
    %s88 = sphi 0, %s88
    %s90 = sphi 0, %s88
    %s91 = sphi 0, %s90
    %s105 = sphi 0, %s91
    %s109 = sphi 0, %s109
    %s111 = sphi 0, %s109
    %s112 = sphi 0, %s111
    %s126 = sphi 0, %s112
    %s130 = sphi 0, %s130
    %s132 = sphi 0, %s130
    %s133 = sphi 0, %s132
    %s147 = sphi 0, %s133
    %s153 = sphi 0, %s155
    %s156 = sphi 0, %s153
    %s157 = sphi 0, %s156
    %s173 = sphi 0, %s157
  $region4: #{tpu_custom_call.1} parent=0 // loop_header_branch
    %15 = sbr.rel (%p13) target = $region8
  $region5: #{tpu_custom_call.1} parent=0 // loop_body
    %s17 = ssub.s32 %s12, 1
    %s18 = ssub.s32 %s12, 2
    %s19 = sadd.s32 %s12, 1
    %s20 = ssub.s32 %s12, %s19
    %p21 = scmp.eq.s32.totalorder %s20, 0
    %s23 = sadd.s32 %s22, 1
    %s24 = scalar_select %p21, %s22, %s23
    %p27 = pneg %p21
    %p28 = scmp.eq.s32.totalorder %s12, 1
    %p29 = por %p27, %p28
    %p30 = scmp.ne.s32.totalorder %s22, %s25
    %p31 = scmp.eq.s32.totalorder %s12, 0
    %p32 = por %p30, %p31
    %p33 = scmp.ne.s32.totalorder %s22, %s25
    %p34 = scmp.eq.s32.totalorder %s17, 1
    %p35 = por %p33, %p34
    %p36 = scmp.ne.s32.totalorder %s25, %s26
    %p37 = scmp.eq.s32.totalorder %s17, 0
    %p38 = por %p36, %p37
    %p39 = scmp.ne.s32.totalorder %s25, %s26
    %p40 = scmp.eq.s32.totalorder %s18, 1
    %p41 = por %p39, %p40
    %p43 = scmp.ne.s32.totalorder %s26, %s42
    %p44 = scmp.eq.s32.totalorder %s18, 0
    %p45 = por %p43, %p44
    %s47 = sadd.s32 %s46, 1
    %p50 = scmp.eq.s32.totalorder %s12, 1
    %p51 = scmp.ne.s32.totalorder %s46, %s48
    %p52 = scmp.eq.s32.totalorder %s12, 0
    %p53 = por %p51, %p52
    %p54 = scmp.ne.s32.totalorder %s46, %s48
    %p55 = scmp.eq.s32.totalorder %s17, 1
    %p56 = por %p54, %p55
    %p57 = scmp.ne.s32.totalorder %s48, %s49
    %p58 = scmp.eq.s32.totalorder %s17, 0
    %p59 = por %p57, %p58
    %p60 = scmp.ne.s32.totalorder %s48, %s49
    %p61 = scmp.eq.s32.totalorder %s18, 1
    %p62 = por %p60, %p61
    %p64 = scmp.ne.s32.totalorder %s49, %s63
    %p65 = scmp.eq.s32.totalorder %s18, 0
    %p66 = por %p64, %p65
    %s68 = sadd.s32 %s67, 1
    %p71 = scmp.eq.s32.totalorder %s12, 1
    %p72 = scmp.ne.s32.totalorder %s67, %s69
    %p73 = scmp.eq.s32.totalorder %s12, 0
    %p74 = por %p72, %p73
    %p75 = scmp.ne.s32.totalorder %s67, %s69
    %p76 = scmp.eq.s32.totalorder %s17, 1
    %p77 = por %p75, %p76
    %p78 = scmp.ne.s32.totalorder %s69, %s70
    %p79 = scmp.eq.s32.totalorder %s17, 0
    %p80 = por %p78, %p79
    %p81 = scmp.ne.s32.totalorder %s69, %s70
    %p82 = scmp.eq.s32.totalorder %s18, 1
    %p83 = por %p81, %p82
    %p85 = scmp.ne.s32.totalorder %s70, %s84
    %p86 = scmp.eq.s32.totalorder %s18, 0
    %p87 = por %p85, %p86
    %s89 = sadd.s32 %s88, 1
    %p92 = scmp.eq.s32.totalorder %s12, 1
    %p93 = scmp.ne.s32.totalorder %s88, %s90
    %p94 = scmp.eq.s32.totalorder %s12, 0
    %p95 = por %p93, %p94
    %p96 = scmp.ne.s32.totalorder %s88, %s90
    %p97 = scmp.eq.s32.totalorder %s17, 1
    %p98 = por %p96, %p97
    %p99 = scmp.ne.s32.totalorder %s90, %s91
    %p100 = scmp.eq.s32.totalorder %s17, 0
    %p101 = por %p99, %p100
    %p102 = scmp.ne.s32.totalorder %s90, %s91
    %p103 = scmp.eq.s32.totalorder %s18, 1
    %p104 = por %p102, %p103
    %p106 = scmp.ne.s32.totalorder %s91, %s105
    %p107 = scmp.eq.s32.totalorder %s18, 0
    %p108 = por %p106, %p107
    %s110 = sadd.s32 %s109, 1
    %p113 = scmp.eq.s32.totalorder %s12, 1
    %p114 = scmp.ne.s32.totalorder %s109, %s111
    %p115 = scmp.eq.s32.totalorder %s12, 0
    %p116 = por %p114, %p115
    %p117 = scmp.ne.s32.totalorder %s109, %s111
    %p118 = scmp.eq.s32.totalorder %s17, 1
    %p119 = por %p117, %p118
    %p120 = scmp.ne.s32.totalorder %s111, %s112
    %p121 = scmp.eq.s32.totalorder %s17, 0
    %p122 = por %p120, %p121
    %p123 = scmp.ne.s32.totalorder %s111, %s112
    %p124 = scmp.eq.s32.totalorder %s18, 1
    %p125 = por %p123, %p124
    %p127 = scmp.ne.s32.totalorder %s112, %s126
    %p128 = scmp.eq.s32.totalorder %s18, 0
    %p129 = por %p127, %p128
    %s131 = sadd.s32 %s130, 1
    %p134 = scmp.eq.s32.totalorder %s12, 1
    %p135 = scmp.ne.s32.totalorder %s130, %s132
    %p136 = scmp.eq.s32.totalorder %s12, 0
    %p137 = por %p135, %p136
    %p138 = scmp.ne.s32.totalorder %s130, %s132
    %p139 = scmp.eq.s32.totalorder %s17, 1
    %p140 = por %p138, %p139
    %p141 = scmp.ne.s32.totalorder %s132, %s133
    %p142 = scmp.eq.s32.totalorder %s17, 0
    %p143 = por %p141, %p142
    %p144 = scmp.ne.s32.totalorder %s132, %s133
    %p145 = scmp.eq.s32.totalorder %s18, 1
    %p146 = por %p144, %p145
    %p148 = scmp.ne.s32.totalorder %s133, %s147
    %p149 = scmp.eq.s32.totalorder %s18, 0
    %p150 = por %p148, %p149
    %s151 = ssub.s32 %s12, %s19
    %p152 = scmp.eq.s32.totalorder %s151, 0
    %s154 = sadd.s32 %s153, 1
    %s155 = scalar_select %p152, %s153, %s154
    %p158 = pneg %p152
    %p159 = scmp.eq.s32.totalorder %s12, 1
    %p160 = por %p158, %p159
    %p161 = scmp.ne.s32.totalorder %s153, %s156
    %p162 = scmp.eq.s32.totalorder %s12, 0
    %p163 = por %p161, %p162
    %p164 = scmp.ne.s32.totalorder %s153, %s156
    %p165 = scmp.eq.s32.totalorder %s17, 1
    %p166 = por %p164, %p165
    %p167 = scmp.ne.s32.totalorder %s156, %s157
    %p168 = scmp.eq.s32.totalorder %s17, 0
    %p169 = por %p167, %p168
    %p170 = scmp.ne.s32.totalorder %s156, %s157
    %p171 = scmp.eq.s32.totalorder %s18, 1
    %p172 = por %p170, %p171
    %p174 = scmp.ne.s32.totalorder %s157, %s173
    %p175 = scmp.eq.s32.totalorder %s18, 0
    %p176 = por %p174, %p175
    %p177 = scmp.le.s32.totalorder 1, %s12
    %p178 = scmp.lt.s32.totalorder %s12, 3
    %p179 = pnand %p177, %p178
    %p180 = pneg %p179
    // Predicated region
    $region9: #{tpu_custom_call.1} parent=5 // pred_check
      _
    $region10: #{tpu_custom_call.1} parent=5 // pred_check_branch
      %182 = sbr.rel (%p179) target = $region12
    $region11: #{tpu_custom_call.1} parent=5 // pred_region
      %s183 = ssub.s32 %s12, 1
      // Predicated region
      $region13: #{tpu_custom_call.1} parent=11 // pred_check
        %p184 = pneg %p59
      $region14: #{tpu_custom_call.1} parent=11 // pred_check_branch
        %186 = sbr.rel (%p184) target = $region16
      $region15: #{tpu_custom_call.1} parent=11 // pred_region
        _
      $region16: #{tpu_custom_call.1} parent=11 // pred_fallthru
        _
      // Predicated region
      $region17: #{tpu_custom_call.1} parent=11 // pred_check
        %p187 = pneg %p80
      $region18: #{tpu_custom_call.1} parent=11 // pred_check_branch
        %189 = sbr.rel (%p187) target = $region20
      $region19: #{tpu_custom_call.1} parent=11 // pred_region
        _
      $region20: #{tpu_custom_call.1} parent=11 // pred_fallthru
        _
      // Predicated region
      $region21: #{tpu_custom_call.1} parent=11 // pred_check
        %p190 = pneg %p101
      $region22: #{tpu_custom_call.1} parent=11 // pred_check_branch
        %192 = sbr.rel (%p190) target = $region24
      $region23: #{tpu_custom_call.1} parent=11 // pred_region
        _
      $region24: #{tpu_custom_call.1} parent=11 // pred_fallthru
        _
      // Predicated region
      $region25: #{tpu_custom_call.1} parent=11 // pred_check
        %p193 = pneg %p122
      $region26: #{tpu_custom_call.1} parent=11 // pred_check_branch
        %195 = sbr.rel (%p193) target = $region28
      $region27: #{tpu_custom_call.1} parent=11 // pred_region
        _
      $region28: #{tpu_custom_call.1} parent=11 // pred_fallthru
        _
      // Predicated region
      $region29: #{tpu_custom_call.1} parent=11 // pred_check
        %p196 = pneg %p143
      $region30: #{tpu_custom_call.1} parent=11 // pred_check_branch
        %198 = sbr.rel (%p196) target = $region32
      $region31: #{tpu_custom_call.1} parent=11 // pred_region
        _
      $region32: #{tpu_custom_call.1} parent=11 // pred_fallthru
        _
    $region12: #{tpu_custom_call.1} parent=5 // pred_fallthru
      _
    %p199 = scmp.lt.s32.totalorder %s12, 2
    // Predicated region
    $region33: #{tpu_custom_call.1} parent=5 // pred_check
      %p200 = pneg %p199
    $region34: #{tpu_custom_call.1} parent=5 // pred_check_branch
      %202 = sbr.rel (%p200) target = $region36
    $region35: #{tpu_custom_call.1} parent=5 // pred_region
      // Predicated region
      $region37: #{tpu_custom_call.1} parent=35 // pred_check
        %p203 = pneg %p32
      $region38: #{tpu_custom_call.1} parent=35 // pred_check_branch
        %205 = sbr.rel (%p203) target = $region40
      $region39: #{tpu_custom_call.1} parent=35 // pred_region
        %s206 = smul.u32 4, %s12
        %p207 = scmp.lt.s32.totalorder %s206, 7
        %s208 = scalar_select %p207, %s206, 7
        %s209 = smul.addr %s208, 8
        %s210 = scalar_lea.vmem %s0, %s209
        %s211 = smul.u32 4, %s12
      $region40: #{tpu_custom_call.1} parent=35 // pred_fallthru
        _
    $region36: #{tpu_custom_call.1} parent=5 // pred_fallthru
      _
    %p212 = scmp.le.s32.totalorder 1, %s12
    %p213 = scmp.lt.s32.totalorder %s12, 3
    %p214 = pnand %p212, %p213
    %p215 = pneg %p214
    // Predicated region
    $region41: #{tpu_custom_call.1} parent=5 // pred_check
      _
    $region42: #{tpu_custom_call.1} parent=5 // pred_check_branch
      %217 = sbr.rel (%p214) target = $region44
    $region43: #{tpu_custom_call.1} parent=5 // pred_region
      %s218 = ssub.s32 %s12, 1
      %s219 = smul.u32 4, %s17
      %p220 = scmp.lt.s32.totalorder %s219, 7
      %s221 = scalar_select %p220, %s219, 7
      %s222 = smul.addr %s221, 8
      %s223 = scalar_lea.vmem %s0, %s222
      %p224 = pneg %p38
      %p225 = pneg %p35
      %p226 = pneg %p59
      %p227 = pneg %p56
      %p228 = pneg %p80
      %p229 = pneg %p77
      %p230 = pneg %p101
      %p231 = pneg %p98
      %p232 = pneg %p122
      %p233 = pneg %p119
      %p234 = pneg %p143
      %p235 = pneg %p140
      %p236 = pneg %p169
      %p237 = pneg %p166
      %s238 = smul.u32 4, %s17
      %p239 = scmp.lt.s32.totalorder %s238, 7
      %s240 = scalar_select %p239, %s238, 7
      %s241 = smul.addr %s240, 8
      %s242 = scalar_lea.vmem %s6, %s241
      %s243 = smul.u32 4, %s17
      %p244 = scmp.lt.s32.totalorder %s243, 7
      %s245 = scalar_select %p244, %s243, 7
      %s246 = smul.addr %s245, 8
      %s247 = scalar_lea.vmem %s0, %s246
      %s248 = smul.u32 4, %s17
      %s249 = smul.u32 4, %s17
      %p250 = scmp.lt.s32.totalorder %s249, 7
      %s251 = scalar_select %p250, %s249, 7
      %s252 = smul.addr %s251, 8
      %s253 = scalar_lea.vmem %s6, %s252
      %s254 = smul.u32 4, %s17
      %v255 = vld [vmem:[%s247] sm:$0xff]
      %v256 = vld [vmem:[%s247 + $0x8] sm:$0xff]
      %v257 = vld [vmem:[%s247 + $0x10] sm:$0xff]
      %v258 = vld [vmem:[%s247 + $0x18] sm:$0xff]
      %v259 = vld [vmem:[%s1] sm:$0xff]
      %v260 = vld [vmem:[%s1 + $0x8] sm:$0xff]
      %v261 = vld [vmem:[%s1 + $0x10] sm:$0xff]
      %v262 = vld [vmem:[%s1 + $0x18] sm:$0xff]
      %v263 = vld [vmem:[%s2] sm:$0x1]
      %v265 = vperm.slane %v263, 0
      %vm267 = vcmask 261120
      %v269 = vsel %vm267, %v255, 0
      %v272 = vsel %vm267, %v256, 0
      %v275 = vsel %vm267, %v257, 0
      %v278 = vsel %vm267, %v258, 0
      %280 = vmatpush.msra.mxu0 0.0
      %281 = vmatpush.msra.mxu0 0.0
      %282 = vmatpush.msra.mxu0 0.0
      %283 = vmatpush.msra.mxu0 0.0
      %284 = vmatpush.msra.mxu0 0.0
      %285 = vmatpush.msra.mxu0 0.0
      %286 = vmatpush.msra.mxu0 0.0
      %287 = vmatpush.msra.mxu0 0.0
      %288 = vmatpush.msra.mxu0 0.0
      %289 = vmatpush.msra.mxu0 0.0
      %290 = vmatpush.msra.mxu0 0.0
      %291 = vmatpush.msra.mxu0 0.0
      %292 = vmatpush.msra.mxu0 %v262
      %293 = vmatpush.msra.mxu0 %v261
      %294 = vmatpush.msra.mxu0 %v260
      %295 = vmatpush.msra.mxu0 %v259
      %296 = vmatmul.f32.gmra.mxu0 %v269
      %v297 = vpop.f32.mrf.mxu0
      %v298 = vadd.f32 %v265, %v297
      %299 = vmatmul.f32.gmra.mxu0 %v272
      %v300 = vpop.f32.mrf.mxu0
      %v301 = vadd.f32 %v265, %v300
      %302 = vmatmul.f32.gmra.mxu0 %v275
      %v303 = vpop.f32.mrf.mxu0
      %v304 = vadd.f32 %v265, %v303
      %305 = vmatmul.f32.gmra.mxu0 %v278
      %v306 = vpop.f32.mrf.mxu0
      %v307 = vadd.f32 %v265, %v306
      %308 = vdwg.mxu0
      %vm309 = vcmask 785408
      %310 = vst.msk [vmem:[#allocation2] sm:$0xff] %vm309, %v298
      %311 = vst.msk [vmem:[#allocation2 + $0x8] sm:$0xff] %vm309, %v301
      %312 = vst.msk [vmem:[#allocation2 + $0x10] sm:$0xff] %vm309, %v304
      %313 = vst.msk [vmem:[#allocation2 + $0x18] sm:$0xff] %vm309, %v307
      %v314 = vld [vmem:[#allocation2] sm:$0xff]
      %v315 = vld [vmem:[#allocation2 + $0x8] sm:$0xff]
      %v316 = vld [vmem:[#allocation2 + $0x10] sm:$0xff]
      %v317 = vld [vmem:[#allocation2 + $0x18] sm:$0xff]
      %320 = vrot.lane.b32.xlu0 %v314, 96
      %v321 = vpop.permute.xlu0 %320
      %322 = vrot.lane.b32.xlu0 %v315, 96
      %v323 = vpop.permute.xlu0 %322
      %vm324 = vcmask 130048
      %v325 = vsel %vm324, %v314, 0
      %v327 = vsel %vm324, %v315, 0
      %v329 = vsel %vm324, %v321, 0
      %v331 = vsel %vm324, %v323, 0
      %333 = vmatpush.xpose.msra.mxu0 0.0
      %334 = vmatpush.xpose.msra.mxu0 0.0
      %335 = vmatpush.xpose.msra.mxu0 0.0
      %336 = vmatpush.xpose.msra.mxu0 0.0
      %337 = vmatpush.xpose.msra.mxu0 0.0
      %338 = vmatpush.xpose.msra.mxu0 0.0
      %339 = vmatpush.xpose.msra.mxu0 0.0
      %340 = vmatpush.xpose.msra.mxu0 0.0
      %341 = vmatpush.xpose.msra.mxu0 0.0
      %342 = vmatpush.xpose.msra.mxu0 0.0
      %343 = vmatpush.xpose.msra.mxu0 0.0
      %344 = vmatpush.xpose.msra.mxu0 0.0
      %345 = vmatpush.xpose.msra.mxu0 0.0
      %346 = vmatpush.xpose.msra.mxu0 0.0
      %347 = vmatpush.xpose.msra.mxu0 %v331
      %348 = vmatpush.xpose.msra.mxu0 %v329
      %349 = vmatmul.f32.gmra.mxu0 %v325
      %v350 = vpop.f32.mrf.mxu0
      %v351 = vadd.f32 0.0, %v350
      %352 = vmatmul.f32.gmra.mxu0 %v327
      %v353 = vpop.f32.mrf.mxu0
      %v354 = vadd.f32 0.0, %v353
      %355 = vdwg.mxu0
      %358 = vrot.lane.b32.xlu0 %v316, 96
      %v359 = vpop.permute.xlu0 %358
      %360 = vrot.lane.b32.xlu0 %v317, 96
      %v361 = vpop.permute.xlu0 %360
      %v362 = vsel %vm324, %v316, 0
      %v364 = vsel %vm324, %v317, 0
      %v366 = vsel %vm324, %v359, 0
      %v368 = vsel %vm324, %v361, 0
      %370 = vmatpush.xpose.msra.mxu0 0.0
      %371 = vmatpush.xpose.msra.mxu0 0.0
      %372 = vmatpush.xpose.msra.mxu0 0.0
      %373 = vmatpush.xpose.msra.mxu0 0.0
      %374 = vmatpush.xpose.msra.mxu0 0.0
      %375 = vmatpush.xpose.msra.mxu0 0.0
      %376 = vmatpush.xpose.msra.mxu0 0.0
      %377 = vmatpush.xpose.msra.mxu0 0.0
      %378 = vmatpush.xpose.msra.mxu0 0.0
      %379 = vmatpush.xpose.msra.mxu0 0.0
      %380 = vmatpush.xpose.msra.mxu0 0.0
      %381 = vmatpush.xpose.msra.mxu0 0.0
      %382 = vmatpush.xpose.msra.mxu0 0.0
      %383 = vmatpush.xpose.msra.mxu0 0.0
      %384 = vmatpush.xpose.msra.mxu0 %v368
      %385 = vmatpush.xpose.msra.mxu0 %v366
      %386 = vmatmul.f32.gmra.mxu0 %v362
      %v387 = vpop.f32.mrf.mxu0
      %v388 = vadd.f32 0.0, %v387
      %389 = vmatmul.f32.gmra.mxu0 %v364
      %v390 = vpop.f32.mrf.mxu0
      %v391 = vadd.f32 0.0, %v390
      %392 = vdwg.mxu0
      %v393 = vmul.f32 %v351, 0.25
      %v394 = vmul.f32 %v354, 0.25
      %v395 = vmul.f32 %v388, 0.25
      %v396 = vmul.f32 %v391, 0.25
      %v397 = vld [vmem:[%s5] sm:$0xff]
      %v398 = vld [vmem:[%s5 + $0x8] sm:$0xff]
      %v399 = vadd.f32 %v393, %v397
      %v400 = vadd.f32 %v394, %v398
      %v401 = vadd.f32 %v395, %v397
      %v402 = vadd.f32 %v396, %v398
      %v403 = vsel %vm324, %v399, -inf
      %404 = vmax.xlane.f32.xlu0 %v403
      %v405 = vpop.xlane.xlu0 %404
      %v406 = vsel %vm324, %v400, -inf
      %407 = vmax.xlane.f32.xlu0 %v406
      %v408 = vpop.xlane.xlu0 %407
      %v409 = vsel %vm324, %v401, -inf
      %410 = vmax.xlane.f32.xlu0 %v409
      %v411 = vpop.xlane.xlu0 %410
      %v412 = vsel %vm324, %v402, -inf
      %413 = vmax.xlane.f32.xlu0 %v412
      %v414 = vpop.xlane.xlu0 %413
      %v415 = vsub.f32 %v399, %v405
      %v416 = vsub.f32 %v400, %v408
      %v417 = vsub.f32 %v401, %v411
      %v418 = vsub.f32 %v402, %v414
      %v419 = vmul.f32 %v415, 1.442695
      %v420 = vpow.pop %v419
      %v421 = vmul.f32 %v416, 1.442695
      %v422 = vpow.pop %v421
      %v423 = vmul.f32 %v417, 1.442695
      %v424 = vpow.pop %v423
      %v425 = vmul.f32 %v418, 1.442695
      %v426 = vpow.pop %v425
      %v427 = vsel %vm324, %v420, 0.0
      %428 = vadd.xlane.f32.xlu0 %v427
      %v429 = vpop.xlane.xlu0 %428
      %v430 = vsel %vm324, %v422, 0.0
      %431 = vadd.xlane.f32.xlu0 %v430
      %v432 = vpop.xlane.xlu0 %431
      %v433 = vsel %vm324, %v424, 0.0
      %434 = vadd.xlane.f32.xlu0 %v433
      %v435 = vpop.xlane.xlu0 %434
      %v436 = vsel %vm324, %v426, 0.0
      %437 = vadd.xlane.f32.xlu0 %v436
      %v438 = vpop.xlane.xlu0 %437
      %v439 = vrcp.pop %v429
      %v440 = vmul.f32 %v429, %v439
      %v441 = vsub.f32 1.0, %v440
      %v442 = vmul.f32 %v439, %v441
      %v443 = vadd.f32 %v439, %v442
      %vm444 = vweird.f32 %v429
      %vm445 = vweird.f32 %v439
      %vm446 = vmor %vm444, %vm445
      %v447 = vsel %vm446, %v439, %v443
      %v448 = vand.u32 2147483647, %v429
      %vm449 = vcmp.eq.f32.partialorder %v448, 8.507059e+37
      %v450 = vand.u32 %v429, 2147483648
      %v451 = vor.u32 1.1754944e-38, %v450
      %v452 = vsel %vm449, %v451, %v447
      %v453 = vrcp.pop %v432
      %v454 = vmul.f32 %v432, %v453
      %v455 = vsub.f32 1.0, %v454
      %v456 = vmul.f32 %v453, %v455
      %v457 = vadd.f32 %v453, %v456
      %vm458 = vweird.f32 %v432
      %vm459 = vweird.f32 %v453
      %vm460 = vmor %vm458, %vm459
      %v461 = vsel %vm460, %v453, %v457
      %v462 = vand.u32 2147483647, %v432
      %vm463 = vcmp.eq.f32.partialorder %v462, 8.507059e+37
      %v464 = vand.u32 %v432, 2147483648
      %v465 = vor.u32 1.1754944e-38, %v464
      %v466 = vsel %vm463, %v465, %v461
      %v467 = vrcp.pop %v435
      %v468 = vmul.f32 %v435, %v467
      %v469 = vsub.f32 1.0, %v468
      %v470 = vmul.f32 %v467, %v469
      %v471 = vadd.f32 %v467, %v470
      %vm472 = vweird.f32 %v435
      %vm473 = vweird.f32 %v467
      %vm474 = vmor %vm472, %vm473
      %v475 = vsel %vm474, %v467, %v471
      %v476 = vand.u32 2147483647, %v435
      %vm477 = vcmp.eq.f32.partialorder %v476, 8.507059e+37
      %v478 = vand.u32 %v435, 2147483648
      %v479 = vor.u32 1.1754944e-38, %v478
      %v480 = vsel %vm477, %v479, %v475
      %v481 = vrcp.pop %v438
      %v482 = vmul.f32 %v438, %v481
      %v483 = vsub.f32 1.0, %v482
      %v484 = vmul.f32 %v481, %v483
      %v485 = vadd.f32 %v481, %v484
      %vm486 = vweird.f32 %v438
      %vm487 = vweird.f32 %v481
      %vm488 = vmor %vm486, %vm487
      %v489 = vsel %vm488, %v481, %v485
      %v490 = vand.u32 2147483647, %v438
      %vm491 = vcmp.eq.f32.partialorder %v490, 8.507059e+37
      %v492 = vand.u32 %v438, 2147483648
      %v493 = vor.u32 1.1754944e-38, %v492
      %v494 = vsel %vm491, %v493, %v489
      %v495 = vmul.f32 %v420, %v452
      %v496 = vmul.f32 %v422, %v466
      %v497 = vmul.f32 %v424, %v480
      %v498 = vmul.f32 %v426, %v494
      %499 = vrot.lane.b32.xlu0 %v314, 64
      %v500 = vpop.permute.xlu0 %499
      %501 = vrot.lane.b32.xlu0 %v315, 64
      %v502 = vpop.permute.xlu0 %501
      %v506 = vsel %vm324, %v495, 0
      %v509 = vsel %vm324, %v496, 0
      %511 = vmatpush.msra.mxu0 0.0
      %512 = vmatpush.msra.mxu0 0.0
      %513 = vmatpush.msra.mxu0 0.0
      %514 = vmatpush.msra.mxu0 0.0
      %515 = vmatpush.msra.mxu0 0.0
      %516 = vmatpush.msra.mxu0 0.0
      %517 = vmatpush.msra.mxu0 0.0
      %518 = vmatpush.msra.mxu0 0.0
      %519 = vmatpush.msra.mxu0 0.0
      %520 = vmatpush.msra.mxu0 0.0
      %521 = vmatpush.msra.mxu0 0.0
      %522 = vmatpush.msra.mxu0 0.0
      %523 = vmatpush.msra.mxu0 0.0
      %524 = vmatpush.msra.mxu0 0.0
      %525 = vmatpush.msra.mxu0 %v502
      %526 = vmatpush.msra.mxu0 %v500
      %527 = vmatmul.f32.gmra.mxu0 %v506
      %v528 = vpop.f32.mrf.mxu0
      %v529 = vadd.f32 0.0, %v528
      %530 = vmatmul.f32.gmra.mxu0 %v509
      %v531 = vpop.f32.mrf.mxu0
      %v532 = vadd.f32 0.0, %v531
      %533 = vdwg.mxu0
      %534 = vrot.lane.b32.xlu0 %v316, 64
      %v535 = vpop.permute.xlu0 %534
      %536 = vrot.lane.b32.xlu0 %v317, 64
      %v537 = vpop.permute.xlu0 %536
      %v541 = vsel %vm324, %v497, 0
      %v544 = vsel %vm324, %v498, 0
      %546 = vmatpush.msra.mxu0 0.0
      %547 = vmatpush.msra.mxu0 0.0
      %548 = vmatpush.msra.mxu0 0.0
      %549 = vmatpush.msra.mxu0 0.0
      %550 = vmatpush.msra.mxu0 0.0
      %551 = vmatpush.msra.mxu0 0.0
      %552 = vmatpush.msra.mxu0 0.0
      %553 = vmatpush.msra.mxu0 0.0
      %554 = vmatpush.msra.mxu0 0.0
      %555 = vmatpush.msra.mxu0 0.0
      %556 = vmatpush.msra.mxu0 0.0
      %557 = vmatpush.msra.mxu0 0.0
      %558 = vmatpush.msra.mxu0 0.0
      %559 = vmatpush.msra.mxu0 0.0
      %560 = vmatpush.msra.mxu0 %v537
      %561 = vmatpush.msra.mxu0 %v535
      %562 = vmatmul.f32.gmra.mxu0 %v541
      %v563 = vpop.f32.mrf.mxu0
      %v564 = vadd.f32 0.0, %v563
      %565 = vmatmul.f32.gmra.mxu0 %v544
      %v566 = vpop.f32.mrf.mxu0
      %v567 = vadd.f32 0.0, %v566
      %568 = vdwg.mxu0
      %569 = vst.msk [vmem:[#allocation3] sm:$0xff] %vm324, %v529
      %570 = vst.msk [vmem:[#allocation3 + $0x8] sm:$0xff] %vm324, %v532
      %571 = vst.msk [vmem:[#allocation3 + $0x10] sm:$0xff] %vm324, %v564
      %572 = vst.msk [vmem:[#allocation3 + $0x18] sm:$0xff] %vm324, %v567
      %v573 = vld [vmem:[#allocation2] sm:$0xff]
      %v574 = vld [vmem:[#allocation2 + $0x8] sm:$0xff]
      %v575 = vld [vmem:[#allocation2 + $0x10] sm:$0xff]
      %v576 = vld [vmem:[#allocation2 + $0x18] sm:$0xff]
      %579 = vrot.lane.b32.xlu0 %v573, 112
      %v580 = vpop.permute.xlu0 %579
      %581 = vrot.lane.b32.xlu0 %v574, 112
      %v582 = vpop.permute.xlu0 %581
      %583 = vrot.lane.b32.xlu0 %v573, 80
      %v584 = vpop.permute.xlu0 %583
      %585 = vrot.lane.b32.xlu0 %v574, 80
      %v586 = vpop.permute.xlu0 %585
      %v587 = vsel %vm324, %v580, 0
      %v589 = vsel %vm324, %v582, 0
      %v591 = vsel %vm324, %v584, 0
      %v593 = vsel %vm324, %v586, 0
      %595 = vmatpush.xpose.msra.mxu0 0.0
      %596 = vmatpush.xpose.msra.mxu0 0.0
      %597 = vmatpush.xpose.msra.mxu0 0.0
      %598 = vmatpush.xpose.msra.mxu0 0.0
      %599 = vmatpush.xpose.msra.mxu0 0.0
      %600 = vmatpush.xpose.msra.mxu0 0.0
      %601 = vmatpush.xpose.msra.mxu0 0.0
      %602 = vmatpush.xpose.msra.mxu0 0.0
      %603 = vmatpush.xpose.msra.mxu0 0.0
      %604 = vmatpush.xpose.msra.mxu0 0.0
      %605 = vmatpush.xpose.msra.mxu0 0.0
      %606 = vmatpush.xpose.msra.mxu0 0.0
      %607 = vmatpush.xpose.msra.mxu0 0.0
      %608 = vmatpush.xpose.msra.mxu0 0.0
      %609 = vmatpush.xpose.msra.mxu0 %v593
      %610 = vmatpush.xpose.msra.mxu0 %v591
      %611 = vmatmul.f32.gmra.mxu0 %v587
      %v612 = vpop.f32.mrf.mxu0
      %v613 = vadd.f32 0.0, %v612
      %614 = vmatmul.f32.gmra.mxu0 %v589
      %v615 = vpop.f32.mrf.mxu0
      %v616 = vadd.f32 0.0, %v615
      %617 = vdwg.mxu0
      %620 = vrot.lane.b32.xlu0 %v575, 112
      %v621 = vpop.permute.xlu0 %620
      %622 = vrot.lane.b32.xlu0 %v576, 112
      %v623 = vpop.permute.xlu0 %622
      %624 = vrot.lane.b32.xlu0 %v575, 80
      %v625 = vpop.permute.xlu0 %624
      %626 = vrot.lane.b32.xlu0 %v576, 80
      %v627 = vpop.permute.xlu0 %626
      %v628 = vsel %vm324, %v621, 0
      %v630 = vsel %vm324, %v623, 0
      %v632 = vsel %vm324, %v625, 0
      %v634 = vsel %vm324, %v627, 0
      %636 = vmatpush.xpose.msra.mxu0 0.0
      %637 = vmatpush.xpose.msra.mxu0 0.0
      %638 = vmatpush.xpose.msra.mxu0 0.0
      %639 = vmatpush.xpose.msra.mxu0 0.0
      %640 = vmatpush.xpose.msra.mxu0 0.0
      %641 = vmatpush.xpose.msra.mxu0 0.0
      %642 = vmatpush.xpose.msra.mxu0 0.0
      %643 = vmatpush.xpose.msra.mxu0 0.0
      %644 = vmatpush.xpose.msra.mxu0 0.0
      %645 = vmatpush.xpose.msra.mxu0 0.0
      %646 = vmatpush.xpose.msra.mxu0 0.0
      %647 = vmatpush.xpose.msra.mxu0 0.0
      %648 = vmatpush.xpose.msra.mxu0 0.0
      %649 = vmatpush.xpose.msra.mxu0 0.0
      %650 = vmatpush.xpose.msra.mxu0 %v634
      %651 = vmatpush.xpose.msra.mxu0 %v632
      %652 = vmatmul.f32.gmra.mxu0 %v628
      %v653 = vpop.f32.mrf.mxu0
      %v654 = vadd.f32 0.0, %v653
      %655 = vmatmul.f32.gmra.mxu0 %v630
      %v656 = vpop.f32.mrf.mxu0
      %v657 = vadd.f32 0.0, %v656
      %658 = vdwg.mxu0
      %v659 = vmul.f32 %v613, 0.25
      %v660 = vmul.f32 %v616, 0.25
      %v661 = vmul.f32 %v654, 0.25
      %v662 = vmul.f32 %v657, 0.25
      %s663 = scalar_lea.vmem %s5, 16
      %v664 = vld [vmem:[%s663] sm:$0xff]
      %v665 = vld [vmem:[%s663 + $0x8] sm:$0xff]
      %v666 = vadd.f32 %v659, %v664
      %v667 = vadd.f32 %v660, %v665
      %v668 = vadd.f32 %v661, %v664
      %v669 = vadd.f32 %v662, %v665
      %v670 = vsel %vm324, %v666, -inf
      %671 = vmax.xlane.f32.xlu0 %v670
      %v672 = vpop.xlane.xlu0 %671
      %v673 = vsel %vm324, %v667, -inf
      %674 = vmax.xlane.f32.xlu0 %v673
      %v675 = vpop.xlane.xlu0 %674
      %v676 = vsel %vm324, %v668, -inf
      %677 = vmax.xlane.f32.xlu0 %v676
      %v678 = vpop.xlane.xlu0 %677
      %v679 = vsel %vm324, %v669, -inf
      %680 = vmax.xlane.f32.xlu0 %v679
      %v681 = vpop.xlane.xlu0 %680
      %v682 = vsub.f32 %v666, %v672
      %v683 = vsub.f32 %v667, %v675
      %v684 = vsub.f32 %v668, %v678
      %v685 = vsub.f32 %v669, %v681
      %v686 = vmul.f32 %v682, 1.442695
      %v687 = vpow.pop %v686
      %v688 = vmul.f32 %v683, 1.442695
      %v689 = vpow.pop %v688
      %v690 = vmul.f32 %v684, 1.442695
      %v691 = vpow.pop %v690
      %v692 = vmul.f32 %v685, 1.442695
      %v693 = vpow.pop %v692
      %v694 = vsel %vm324, %v687, 0.0
      %695 = vadd.xlane.f32.xlu0 %v694
      %v696 = vpop.xlane.xlu0 %695
      %v697 = vsel %vm324, %v689, 0.0
      %698 = vadd.xlane.f32.xlu0 %v697
      %v699 = vpop.xlane.xlu0 %698
      %v700 = vsel %vm324, %v691, 0.0
      %701 = vadd.xlane.f32.xlu0 %v700
      %v702 = vpop.xlane.xlu0 %701
      %v703 = vsel %vm324, %v693, 0.0
      %704 = vadd.xlane.f32.xlu0 %v703
      %v705 = vpop.xlane.xlu0 %704
      %v706 = vrcp.pop %v696
      %v707 = vmul.f32 %v696, %v706
      %v708 = vsub.f32 1.0, %v707
      %v709 = vmul.f32 %v706, %v708
      %v710 = vadd.f32 %v706, %v709
      %vm711 = vweird.f32 %v696
      %vm712 = vweird.f32 %v706
      %vm713 = vmor %vm711, %vm712
      %v714 = vsel %vm713, %v706, %v710
      %v715 = vand.u32 2147483647, %v696
      %vm716 = vcmp.eq.f32.partialorder %v715, 8.507059e+37
      %v717 = vand.u32 %v696, 2147483648
      %v718 = vor.u32 1.1754944e-38, %v717
      %v719 = vsel %vm716, %v718, %v714
      %v720 = vrcp.pop %v699
      %v721 = vmul.f32 %v699, %v720
      %v722 = vsub.f32 1.0, %v721
      %v723 = vmul.f32 %v720, %v722
      %v724 = vadd.f32 %v720, %v723
      %vm725 = vweird.f32 %v699
      %vm726 = vweird.f32 %v720
      %vm727 = vmor %vm725, %vm726
      %v728 = vsel %vm727, %v720, %v724
      %v729 = vand.u32 2147483647, %v699
      %vm730 = vcmp.eq.f32.partialorder %v729, 8.507059e+37
      %v731 = vand.u32 %v699, 2147483648
      %v732 = vor.u32 1.1754944e-38, %v731
      %v733 = vsel %vm730, %v732, %v728
      %v734 = vrcp.pop %v702
      %v735 = vmul.f32 %v702, %v734
      %v736 = vsub.f32 1.0, %v735
      %v737 = vmul.f32 %v734, %v736
      %v738 = vadd.f32 %v734, %v737
      %vm739 = vweird.f32 %v702
      %vm740 = vweird.f32 %v734
      %vm741 = vmor %vm739, %vm740
      %v742 = vsel %vm741, %v734, %v738
      %v743 = vand.u32 2147483647, %v702
      %vm744 = vcmp.eq.f32.partialorder %v743, 8.507059e+37
      %v745 = vand.u32 %v702, 2147483648
      %v746 = vor.u32 1.1754944e-38, %v745
      %v747 = vsel %vm744, %v746, %v742
      %v748 = vrcp.pop %v705
      %v749 = vmul.f32 %v705, %v748
      %v750 = vsub.f32 1.0, %v749
      %v751 = vmul.f32 %v748, %v750
      %v752 = vadd.f32 %v748, %v751
      %vm753 = vweird.f32 %v705
      %vm754 = vweird.f32 %v748
      %vm755 = vmor %vm753, %vm754
      %v756 = vsel %vm755, %v748, %v752
      %v757 = vand.u32 2147483647, %v705
      %vm758 = vcmp.eq.f32.partialorder %v757, 8.507059e+37
      %v759 = vand.u32 %v705, 2147483648
      %v760 = vor.u32 1.1754944e-38, %v759
      %v761 = vsel %vm758, %v760, %v756
      %v762 = vmul.f32 %v687, %v719
      %v763 = vmul.f32 %v689, %v733
      %v764 = vmul.f32 %v691, %v747
      %v765 = vmul.f32 %v693, %v761
      %766 = vrot.lane.b32.xlu0 %v573, 48
      %v767 = vpop.permute.xlu0 %766
      %768 = vrot.lane.b32.xlu0 %v574, 48
      %v769 = vpop.permute.xlu0 %768
      %v773 = vsel %vm324, %v762, 0
      %v776 = vsel %vm324, %v763, 0
      %778 = vmatpush.msra.mxu0 0.0
      %779 = vmatpush.msra.mxu0 0.0
      %780 = vmatpush.msra.mxu0 0.0
      %781 = vmatpush.msra.mxu0 0.0
      %782 = vmatpush.msra.mxu0 0.0
      %783 = vmatpush.msra.mxu0 0.0
      %784 = vmatpush.msra.mxu0 0.0
      %785 = vmatpush.msra.mxu0 0.0
      %786 = vmatpush.msra.mxu0 0.0
      %787 = vmatpush.msra.mxu0 0.0
      %788 = vmatpush.msra.mxu0 0.0
      %789 = vmatpush.msra.mxu0 0.0
      %790 = vmatpush.msra.mxu0 0.0
      %791 = vmatpush.msra.mxu0 0.0
      %792 = vmatpush.msra.mxu0 %v769
      %793 = vmatpush.msra.mxu0 %v767
      %794 = vmatmul.f32.gmra.mxu0 %v773
      %v795 = vpop.f32.mrf.mxu0
      %v796 = vadd.f32 0.0, %v795
      %797 = vmatmul.f32.gmra.mxu0 %v776
      %v798 = vpop.f32.mrf.mxu0
      %v799 = vadd.f32 0.0, %v798
      %800 = vdwg.mxu0
      %801 = vrot.lane.b32.xlu0 %v575, 48
      %v802 = vpop.permute.xlu0 %801
      %803 = vrot.lane.b32.xlu0 %v576, 48
      %v804 = vpop.permute.xlu0 %803
      %v808 = vsel %vm324, %v764, 0
      %v811 = vsel %vm324, %v765, 0
      %813 = vmatpush.msra.mxu0 0.0
      %814 = vmatpush.msra.mxu0 0.0
      %815 = vmatpush.msra.mxu0 0.0
      %816 = vmatpush.msra.mxu0 0.0
      %817 = vmatpush.msra.mxu0 0.0
      %818 = vmatpush.msra.mxu0 0.0
      %819 = vmatpush.msra.mxu0 0.0
      %820 = vmatpush.msra.mxu0 0.0
      %821 = vmatpush.msra.mxu0 0.0
      %822 = vmatpush.msra.mxu0 0.0
      %823 = vmatpush.msra.mxu0 0.0
      %824 = vmatpush.msra.mxu0 0.0
      %825 = vmatpush.msra.mxu0 0.0
      %826 = vmatpush.msra.mxu0 0.0
      %827 = vmatpush.msra.mxu0 %v804
      %828 = vmatpush.msra.mxu0 %v802
      %829 = vmatmul.f32.gmra.mxu0 %v808
      %v830 = vpop.f32.mrf.mxu0
      %v831 = vadd.f32 0.0, %v830
      %832 = vmatmul.f32.gmra.mxu0 %v811
      %v833 = vpop.f32.mrf.mxu0
      %v834 = vadd.f32 0.0, %v833
      %835 = vdwg.mxu0
      %840 = vrot.lane.b32.xlu0 %v796, 16
      %v841 = vpop.permute.xlu0 %840
      %842 = vrot.lane.b32.xlu0 %v799, 16
      %v843 = vpop.permute.xlu0 %842
      %844 = vrot.lane.b32.xlu0 %v831, 16
      %v845 = vpop.permute.xlu0 %844
      %846 = vrot.lane.b32.xlu0 %v834, 16
      %v847 = vpop.permute.xlu0 %846
      %vm852 = vcmask 261248
      %853 = vst.msk [vmem:[#allocation3] sm:$0xff] %vm852, %v841
      %854 = vst.msk [vmem:[#allocation3 + $0x8] sm:$0xff] %vm852, %v843
      %855 = vst.msk [vmem:[#allocation3 + $0x10] sm:$0xff] %vm852, %v845
      %856 = vst.msk [vmem:[#allocation3 + $0x18] sm:$0xff] %vm852, %v847
      %v857 = vld [vmem:[#allocation3] sm:$0xff]
      %v858 = vld [vmem:[#allocation3 + $0x8] sm:$0xff]
      %v859 = vld [vmem:[#allocation3 + $0x10] sm:$0xff]
      %v860 = vld [vmem:[#allocation3 + $0x18] sm:$0xff]
      %v861 = vld [vmem:[%s3] sm:$0xff]
      %v862 = vld [vmem:[%s3 + $0x8] sm:$0xff]
      %v863 = vld [vmem:[%s3 + $0x10] sm:$0xff]
      %v864 = vld [vmem:[%s3 + $0x18] sm:$0xff]
      %v865 = vld [vmem:[%s4] sm:$0x1]
      %v867 = vperm.slane %v865, 0
      %v870 = vsel %vm267, %v857, 0
      %v873 = vsel %vm267, %v858, 0
      %v876 = vsel %vm267, %v859, 0
      %v879 = vsel %vm267, %v860, 0
      %881 = vmatpush.msra.mxu0 0.0
      %882 = vmatpush.msra.mxu0 0.0
      %883 = vmatpush.msra.mxu0 0.0
      %884 = vmatpush.msra.mxu0 0.0
      %885 = vmatpush.msra.mxu0 0.0
      %886 = vmatpush.msra.mxu0 0.0
      %887 = vmatpush.msra.mxu0 0.0
      %888 = vmatpush.msra.mxu0 0.0
      %889 = vmatpush.msra.mxu0 0.0
      %890 = vmatpush.msra.mxu0 0.0
      %891 = vmatpush.msra.mxu0 0.0
      %892 = vmatpush.msra.mxu0 0.0
      %893 = vmatpush.msra.mxu0 %v864
      %894 = vmatpush.msra.mxu0 %v863
      %895 = vmatpush.msra.mxu0 %v862
      %896 = vmatpush.msra.mxu0 %v861
      %897 = vmatmul.f32.gmra.mxu0 %v870
      %v898 = vpop.f32.mrf.mxu0
      %v899 = vadd.f32 %v867, %v898
      %900 = vmatmul.f32.gmra.mxu0 %v873
      %v901 = vpop.f32.mrf.mxu0
      %v902 = vadd.f32 %v867, %v901
      %903 = vmatmul.f32.gmra.mxu0 %v876
      %v904 = vpop.f32.mrf.mxu0
      %v905 = vadd.f32 %v867, %v904
      %906 = vmatmul.f32.gmra.mxu0 %v879
      %v907 = vpop.f32.mrf.mxu0
      %v908 = vadd.f32 %v867, %v907
      %909 = vdwg.mxu0
      %910 = vst.msk [vmem:[%s253] sm:$0xff] %vm267, %v899
      %911 = vst.msk [vmem:[%s253 + $0x8] sm:$0xff] %vm267, %v902
      %912 = vst.msk [vmem:[%s253 + $0x10] sm:$0xff] %vm267, %v905
      %913 = vst.msk [vmem:[%s253 + $0x18] sm:$0xff] %vm267, %v908
      %s914 = smul.u32 4, %s17
      %p915 = scmp.lt.s32.totalorder %s914, 7
      %s916 = scalar_select %p915, %s914, 7
      %s917 = smul.addr %s916, 8
      %s918 = scalar_lea.vmem %s6, %s917
      // Predicated region
      $region45: #{tpu_custom_call.1} parent=43 // pred_check
        %p919 = pneg %p166
      $region46: #{tpu_custom_call.1} parent=43 // pred_check_branch
        %921 = sbr.rel (%p919) target = $region48
      $region47: #{tpu_custom_call.1} parent=43 // pred_region
        %s922 = smul.u32 4, %s17
      $region48: #{tpu_custom_call.1} parent=43 // pred_fallthru
        _
    $region44: #{tpu_custom_call.1} parent=5 // pred_fallthru
      _
    %p923 = scmp.le.s32.totalorder 2, %s12
    // Predicated region
    $region49: #{tpu_custom_call.1} parent=5 // pred_check
      %p924 = pneg %p923
    $region50: #{tpu_custom_call.1} parent=5 // pred_check_branch
      %926 = sbr.rel (%p924) target = $region52
    $region51: #{tpu_custom_call.1} parent=5 // pred_region
      %s927 = ssub.s32 %s12, 2
      // Predicated region
      $region53: #{tpu_custom_call.1} parent=51 // pred_check
        %p928 = pneg %p172
      $region54: #{tpu_custom_call.1} parent=51 // pred_check_branch
        %930 = sbr.rel (%p928) target = $region56
      $region55: #{tpu_custom_call.1} parent=51 // pred_region
        %s931 = smul.u32 4, %s18
        %p932 = scmp.lt.s32.totalorder %s931, 7
        %s933 = scalar_select %p932, %s931, 7
        %s934 = smul.addr %s933, 8
        %s935 = scalar_lea.vmem %s6, %s934
      $region56: #{tpu_custom_call.1} parent=51 // pred_fallthru
        _
    $region52: #{tpu_custom_call.1} parent=5 // pred_fallthru
      _
  $region6: #{tpu_custom_call.1} parent=0 // loop_footer
    %s16 = sadd.s32 1, %s12
  $region7: #{tpu_custom_call.1} parent=0 // loop_footer_branch
    %11 = sbr.rel target = $region3
  $region8: #{tpu_custom_call.1} parent=0 // loop_exit
    _

// kernel: tpu_custom_call.1
$region0: #{tpu_custom_call.1}
  #allocation0 [shape = 'u32[]', space=smem, size = 0x4, offset = 0x4, fixed_abs, tag = 'smem constant byte address 0x4 - core index']
  #allocation1 [shape = 'u32[72,128]{1,0:T(1,128)}', space=vmem, size = 0x9000, scoped, tag = 'internal scratch']
  #allocation2 [shape = 'f32[2,16,96]{2,1,0:T(8,128)}', space=vmem, size = 0x4000, scoped, tag = 'scratch operand']
  #allocation3 [shape = 'f32[2,16,32]{2,1,0:T(8,128)}', space=vmem, size = 0x4000, scoped, tag = 'scratch operand']
  %s0 = inlined_call_operand.vmem [shape: f32[64,32], index: 0, kind: input, shape index: {}]
  %s1 = inlined_call_operand.vmem [shape: f32[32,96], index: 1, kind: input, shape index: {}]
  %s2 = inlined_call_operand.vmem [shape: f32[1,96], index: 2, kind: input, shape index: {}]
  %s3 = inlined_call_operand.vmem [shape: f32[32,32], index: 3, kind: input, shape index: {}]
  %s4 = inlined_call_operand.vmem [shape: f32[1,32], index: 4, kind: input, shape index: {}]
  %s5 = inlined_call_operand.vmem [shape: f32[2,16,16], index: 5, kind: input, shape index: {}]
  %s6 = inlined_call_operand.vmem [shape: f32[64,32], index: 6, kind: output, shape index: {}]
  %s7 = sld [smem:[#allocation0]]
  $region57: #{tpu_custom_call.1} parent=0
    _
  %s9 = ssub.s32 1, %s7
  %s10 = scalar_select 0, %s9, %s7
  loop: start=0, step=1, limit=4
  $region2: #{tpu_custom_call.1} parent=0 // loop_pre_header
    _
  $region3: #{tpu_custom_call.1} parent=0 // loop_header
    %s12 = sphi 0, %s16
    %p13 = scmp.ge.s32.totalorder %s12, 4
    %s22 = sphi 0, %s24
    %s25 = sphi 0, %s22
    %s26 = sphi 0, %s25
    %s42 = sphi 0, %s26
    %s46 = sphi 0, %s46
    %s48 = sphi 0, %s46
    %s49 = sphi 0, %s48
    %s63 = sphi 0, %s49
    %s67 = sphi 0, %s67
    %s69 = sphi 0, %s67
    %s70 = sphi 0, %s69
    %s84 = sphi 0, %s70
    %s88 = sphi 0, %s88
    %s90 = sphi 0, %s88
    %s91 = sphi 0, %s90
    %s105 = sphi 0, %s91
    %s109 = sphi 0, %s109
    %s111 = sphi 0, %s109
    %s112 = sphi 0, %s111
    %s126 = sphi 0, %s112
    %s130 = sphi 0, %s130
    %s132 = sphi 0, %s130
    %s133 = sphi 0, %s132
    %s147 = sphi 0, %s133
    %s153 = sphi 0, %s155
    %s156 = sphi 0, %s153
    %s157 = sphi 0, %s156
    %s173 = sphi 0, %s157
  $region4: #{tpu_custom_call.1} parent=0 // loop_header_branch
    %15 = sbr.rel (%p13) target = $region8
  $region5: #{tpu_custom_call.1} parent=0 // loop_body
    %s17 = ssub.s32 %s12, 1
    %s18 = ssub.s32 %s12, 2
    %s19 = sadd.s32 %s12, 1
    %s20 = ssub.s32 %s12, %s19
    %p21 = scmp.eq.s32.totalorder %s20, 0
    %s23 = sadd.s32 %s22, 1
    %s24 = scalar_select %p21, %s22, %s23
    %p27 = pneg %p21
    %p28 = scmp.eq.s32.totalorder %s12, 1
    %p29 = por %p27, %p28
    %p30 = scmp.ne.s32.totalorder %s22, %s25
    %p31 = scmp.eq.s32.totalorder %s12, 0
    %p32 = por %p30, %p31
    %p33 = scmp.ne.s32.totalorder %s22, %s25
    %p34 = scmp.eq.s32.totalorder %s17, 1
    %p35 = por %p33, %p34
    %p36 = scmp.ne.s32.totalorder %s25, %s26
    %p37 = scmp.eq.s32.totalorder %s17, 0
    %p38 = por %p36, %p37
    %p39 = scmp.ne.s32.totalorder %s25, %s26
    %p40 = scmp.eq.s32.totalorder %s18, 1
    %p41 = por %p39, %p40
    %p43 = scmp.ne.s32.totalorder %s26, %s42
    %p44 = scmp.eq.s32.totalorder %s18, 0
    %p45 = por %p43, %p44
    %s47 = sadd.s32 %s46, 1
    %p50 = scmp.eq.s32.totalorder %s12, 1
    %p51 = scmp.ne.s32.totalorder %s46, %s48
    %p52 = scmp.eq.s32.totalorder %s12, 0
    %p53 = por %p51, %p52
    %p54 = scmp.ne.s32.totalorder %s46, %s48
    %p55 = scmp.eq.s32.totalorder %s17, 1
    %p56 = por %p54, %p55
    %p57 = scmp.ne.s32.totalorder %s48, %s49
    %p58 = scmp.eq.s32.totalorder %s17, 0
    %p59 = por %p57, %p58
    %p60 = scmp.ne.s32.totalorder %s48, %s49
    %p61 = scmp.eq.s32.totalorder %s18, 1
    %p62 = por %p60, %p61
    %p64 = scmp.ne.s32.totalorder %s49, %s63
    %p65 = scmp.eq.s32.totalorder %s18, 0
    %p66 = por %p64, %p65
    %s68 = sadd.s32 %s67, 1
    %p71 = scmp.eq.s32.totalorder %s12, 1
    %p72 = scmp.ne.s32.totalorder %s67, %s69
    %p73 = scmp.eq.s32.totalorder %s12, 0
    %p74 = por %p72, %p73
    %p75 = scmp.ne.s32.totalorder %s67, %s69
    %p76 = scmp.eq.s32.totalorder %s17, 1
    %p77 = por %p75, %p76
    %p78 = scmp.ne.s32.totalorder %s69, %s70
    %p79 = scmp.eq.s32.totalorder %s17, 0
    %p80 = por %p78, %p79
    %p81 = scmp.ne.s32.totalorder %s69, %s70
    %p82 = scmp.eq.s32.totalorder %s18, 1
    %p83 = por %p81, %p82
    %p85 = scmp.ne.s32.totalorder %s70, %s84
    %p86 = scmp.eq.s32.totalorder %s18, 0
    %p87 = por %p85, %p86
    %s89 = sadd.s32 %s88, 1
    %p92 = scmp.eq.s32.totalorder %s12, 1
    %p93 = scmp.ne.s32.totalorder %s88, %s90
    %p94 = scmp.eq.s32.totalorder %s12, 0
    %p95 = por %p93, %p94
    %p96 = scmp.ne.s32.totalorder %s88, %s90
    %p97 = scmp.eq.s32.totalorder %s17, 1
    %p98 = por %p96, %p97
    %p99 = scmp.ne.s32.totalorder %s90, %s91
    %p100 = scmp.eq.s32.totalorder %s17, 0
    %p101 = por %p99, %p100
    %p102 = scmp.ne.s32.totalorder %s90, %s91
    %p103 = scmp.eq.s32.totalorder %s18, 1
    %p104 = por %p102, %p103
    %p106 = scmp.ne.s32.totalorder %s91, %s105
    %p107 = scmp.eq.s32.totalorder %s18, 0
    %p108 = por %p106, %p107
    %s110 = sadd.s32 %s109, 1
    %p113 = scmp.eq.s32.totalorder %s12, 1
    %p114 = scmp.ne.s32.totalorder %s109, %s111
    %p115 = scmp.eq.s32.totalorder %s12, 0
    %p116 = por %p114, %p115
    %p117 = scmp.ne.s32.totalorder %s109, %s111
    %p118 = scmp.eq.s32.totalorder %s17, 1
    %p119 = por %p117, %p118
    %p120 = scmp.ne.s32.totalorder %s111, %s112
    %p121 = scmp.eq.s32.totalorder %s17, 0
    %p122 = por %p120, %p121
    %p123 = scmp.ne.s32.totalorder %s111, %s112
    %p124 = scmp.eq.s32.totalorder %s18, 1
    %p125 = por %p123, %p124
    %p127 = scmp.ne.s32.totalorder %s112, %s126
    %p128 = scmp.eq.s32.totalorder %s18, 0
    %p129 = por %p127, %p128
    %s131 = sadd.s32 %s130, 1
    %p134 = scmp.eq.s32.totalorder %s12, 1
    %p135 = scmp.ne.s32.totalorder %s130, %s132
    %p136 = scmp.eq.s32.totalorder %s12, 0
    %p137 = por %p135, %p136
    %p138 = scmp.ne.s32.totalorder %s130, %s132
    %p139 = scmp.eq.s32.totalorder %s17, 1
    %p140 = por %p138, %p139
    %p141 = scmp.ne.s32.totalorder %s132, %s133
    %p142 = scmp.eq.s32.totalorder %s17, 0
    %p143 = por %p141, %p142
    %p144 = scmp.ne.s32.totalorder %s132, %s133
    %p145 = scmp.eq.s32.totalorder %s18, 1
    %p146 = por %p144, %p145
    %p148 = scmp.ne.s32.totalorder %s133, %s147
    %p149 = scmp.eq.s32.totalorder %s18, 0
    %p150 = por %p148, %p149
    %s151 = ssub.s32 %s12, %s19
    %p152 = scmp.eq.s32.totalorder %s151, 0
    %s154 = sadd.s32 %s153, 1
    %s155 = scalar_select %p152, %s153, %s154
    %p158 = pneg %p152
    %p159 = scmp.eq.s32.totalorder %s12, 1
    %p160 = por %p158, %p159
    %p161 = scmp.ne.s32.totalorder %s153, %s156
    %p162 = scmp.eq.s32.totalorder %s12, 0
    %p163 = por %p161, %p162
    %p164 = scmp.ne.s32.totalorder %s153, %s156
    %p165 = scmp.eq.s32.totalorder %s17, 1
    %p166 = por %p164, %p165
    %p167 = scmp.ne.s32.totalorder %s156, %s157
    %p168 = scmp.eq.s32.totalorder %s17, 0
    %p169 = por %p167, %p168
    %p170 = scmp.ne.s32.totalorder %s156, %s157
    %p171 = scmp.eq.s32.totalorder %s18, 1
    %p172 = por %p170, %p171
    %p174 = scmp.ne.s32.totalorder %s157, %s173
    %p175 = scmp.eq.s32.totalorder %s18, 0
    %p176 = por %p174, %p175
    %p177 = scmp.le.s32.totalorder 1, %s12
    %p178 = scmp.lt.s32.totalorder %s12, 3
    %p179 = pnand %p177, %p178
    %p180 = pneg %p179
    // Predicated region
    $region9: #{tpu_custom_call.1} parent=5 // pred_check
      _
    $region10: #{tpu_custom_call.1} parent=5 // pred_check_branch
      %182 = sbr.rel (%p179) target = $region12
    $region11: #{tpu_custom_call.1} parent=5 // pred_region
      %s183 = ssub.s32 %s12, 1
      // Predicated region
      $region13: #{tpu_custom_call.1} parent=11 // pred_check
        %p184 = pneg %p59
      $region14: #{tpu_custom_call.1} parent=11 // pred_check_branch
        %186 = sbr.rel (%p184) target = $region16
      $region15: #{tpu_custom_call.1} parent=11 // pred_region
        _
      $region16: #{tpu_custom_call.1} parent=11 // pred_fallthru
        _
      // Predicated region
      $region17: #{tpu_custom_call.1} parent=11 // pred_check
        %p187 = pneg %p80
      $region18: #{tpu_custom_call.1} parent=11 // pred_check_branch
        %189 = sbr.rel (%p187) target = $region20
      $region19: #{tpu_custom_call.1} parent=11 // pred_region
        _
      $region20: #{tpu_custom_call.1} parent=11 // pred_fallthru
        _
      // Predicated region
      $region21: #{tpu_custom_call.1} parent=11 // pred_check
        %p190 = pneg %p101
      $region22: #{tpu_custom_call.1} parent=11 // pred_check_branch
        %192 = sbr.rel (%p190) target = $region24
      $region23: #{tpu_custom_call.1} parent=11 // pred_region
        _
      $region24: #{tpu_custom_call.1} parent=11 // pred_fallthru
        _
      // Predicated region
      $region25: #{tpu_custom_call.1} parent=11 // pred_check
        %p193 = pneg %p122
      $region26: #{tpu_custom_call.1} parent=11 // pred_check_branch
        %195 = sbr.rel (%p193) target = $region28
      $region27: #{tpu_custom_call.1} parent=11 // pred_region
        _
      $region28: #{tpu_custom_call.1} parent=11 // pred_fallthru
        _
      // Predicated region
      $region29: #{tpu_custom_call.1} parent=11 // pred_check
        %p196 = pneg %p143
      $region30: #{tpu_custom_call.1} parent=11 // pred_check_branch
        %198 = sbr.rel (%p196) target = $region32
      $region31: #{tpu_custom_call.1} parent=11 // pred_region
        _
      $region32: #{tpu_custom_call.1} parent=11 // pred_fallthru
        _
    $region12: #{tpu_custom_call.1} parent=5 // pred_fallthru
      _
    %p199 = scmp.lt.s32.totalorder %s12, 2
    // Predicated region
    $region33: #{tpu_custom_call.1} parent=5 // pred_check
      %p200 = pneg %p199
    $region34: #{tpu_custom_call.1} parent=5 // pred_check_branch
      %202 = sbr.rel (%p200) target = $region36
    $region35: #{tpu_custom_call.1} parent=5 // pred_region
      // Predicated region
      $region37: #{tpu_custom_call.1} parent=35 // pred_check
        %p203 = pneg %p32
      $region38: #{tpu_custom_call.1} parent=35 // pred_check_branch
        %205 = sbr.rel (%p203) target = $region40
      $region39: #{tpu_custom_call.1} parent=35 // pred_region
        %s206 = smul.u32 4, %s12
        %p207 = scmp.lt.s32.totalorder %s206, 7
        %s208 = scalar_select %p207, %s206, 7
        %s209 = smul.addr %s208, 8
        %s210 = scalar_lea.vmem %s0, %s209
        %s211 = smul.u32 4, %s12
      $region40: #{tpu_custom_call.1} parent=35 // pred_fallthru
        _
    $region36: #{tpu_custom_call.1} parent=5 // pred_fallthru
      _
    %p212 = scmp.le.s32.totalorder 1, %s12
    %p213 = scmp.lt.s32.totalorder %s12, 3
    %p214 = pnand %p212, %p213
    %p215 = pneg %p214
    // Predicated region
    $region41: #{tpu_custom_call.1} parent=5 // pred_check
      _
    $region42: #{tpu_custom_call.1} parent=5 // pred_check_branch
      %217 = sbr.rel (%p214) target = $region44
    $region43: #{tpu_custom_call.1} parent=5 // pred_region
      %s218 = ssub.s32 %s12, 1
      %s219 = smul.u32 4, %s17
      %p220 = scmp.lt.s32.totalorder %s219, 7
      %s221 = scalar_select %p220, %s219, 7
      %s222 = smul.addr %s221, 8
      %s223 = scalar_lea.vmem %s0, %s222
      %p224 = pneg %p38
      %p225 = pneg %p35
      %p226 = pneg %p59
      %p227 = pneg %p56
      %p228 = pneg %p80
      %p229 = pneg %p77
      %p230 = pneg %p101
      %p231 = pneg %p98
      %p232 = pneg %p122
      %p233 = pneg %p119
      %p234 = pneg %p143
      %p235 = pneg %p140
      %p236 = pneg %p169
      %p237 = pneg %p166
      %s238 = smul.u32 4, %s17
      %p239 = scmp.lt.s32.totalorder %s238, 7
      %s240 = scalar_select %p239, %s238, 7
      %s241 = smul.addr %s240, 8
      %s242 = scalar_lea.vmem %s6, %s241
      %s243 = smul.u32 4, %s17
      %p244 = scmp.lt.s32.totalorder %s243, 7
      %s245 = scalar_select %p244, %s243, 7
      %s246 = smul.addr %s245, 8
      %s247 = scalar_lea.vmem %s0, %s246
      %s248 = smul.u32 4, %s17
      %s249 = smul.u32 4, %s17
      %p250 = scmp.lt.s32.totalorder %s249, 7
      %s251 = scalar_select %p250, %s249, 7
      %s252 = smul.addr %s251, 8
      %s253 = scalar_lea.vmem %s6, %s252
      %s254 = smul.u32 4, %s17
      %v255 = vld [vmem:[%s247] sm:$0xff]
      %v256 = vld [vmem:[%s247 + $0x8] sm:$0xff]
      %v257 = vld [vmem:[%s247 + $0x10] sm:$0xff]
      %v258 = vld [vmem:[%s247 + $0x18] sm:$0xff]
      %v259 = vld [vmem:[%s1] sm:$0xff]
      %v260 = vld [vmem:[%s1 + $0x8] sm:$0xff]
      %v261 = vld [vmem:[%s1 + $0x10] sm:$0xff]
      %v262 = vld [vmem:[%s1 + $0x18] sm:$0xff]
      %v263 = vld [vmem:[%s2] sm:$0x1]
      %v265 = vperm.slane %v263, 0
      %vm267 = vcmask 261120
      %v269 = vsel %vm267, %v255, 0
      %v272 = vsel %vm267, %v256, 0
      %v275 = vsel %vm267, %v257, 0
      %v278 = vsel %vm267, %v258, 0
      %280 = vmatpush.msra.mxu0 0.0
      %281 = vmatpush.msra.mxu0 0.0
      %282 = vmatpush.msra.mxu0 0.0
      %283 = vmatpush.msra.mxu0 0.0
      %284 = vmatpush.msra.mxu0 0.0
      %285 = vmatpush.msra.mxu0 0.0
      %286 = vmatpush.msra.mxu0 0.0
      %287 = vmatpush.msra.mxu0 0.0
      %288 = vmatpush.msra.mxu0 0.0
      %289 = vmatpush.msra.mxu0 0.0
      %290 = vmatpush.msra.mxu0 0.0
      %291 = vmatpush.msra.mxu0 0.0
      %292 = vmatpush.msra.mxu0 %v262
      %293 = vmatpush.msra.mxu0 %v261
      %294 = vmatpush.msra.mxu0 %v260
      %295 = vmatpush.msra.mxu0 %v259
      %296 = vmatmul.f32.gmra.mxu0 %v269
      %v297 = vpop.f32.mrf.mxu0
      %v298 = vadd.f32 %v265, %v297
      %299 = vmatmul.f32.gmra.mxu0 %v272
      %v300 = vpop.f32.mrf.mxu0
      %v301 = vadd.f32 %v265, %v300
      %302 = vmatmul.f32.gmra.mxu0 %v275
      %v303 = vpop.f32.mrf.mxu0
      %v304 = vadd.f32 %v265, %v303
      %305 = vmatmul.f32.gmra.mxu0 %v278
      %v306 = vpop.f32.mrf.mxu0
      %v307 = vadd.f32 %v265, %v306
      %308 = vdwg.mxu0
      %vm309 = vcmask 785408
      %310 = vst.msk [vmem:[#allocation2] sm:$0xff] %vm309, %v298
      %311 = vst.msk [vmem:[#allocation2 + $0x8] sm:$0xff] %vm309, %v301
      %312 = vst.msk [vmem:[#allocation2 + $0x10] sm:$0xff] %vm309, %v304
      %313 = vst.msk [vmem:[#allocation2 + $0x18] sm:$0xff] %vm309, %v307
      %v314 = vld [vmem:[#allocation2] sm:$0xff]
      %v315 = vld [vmem:[#allocation2 + $0x8] sm:$0xff]
      %v316 = vld [vmem:[#allocation2 + $0x10] sm:$0xff]
      %v317 = vld [vmem:[#allocation2 + $0x18] sm:$0xff]
      %320 = vrot.lane.b32.xlu0 %v314, 96
      %v321 = vpop.permute.xlu0 %320
      %322 = vrot.lane.b32.xlu0 %v315, 96
      %v323 = vpop.permute.xlu0 %322
      %vm324 = vcmask 130048
      %v325 = vsel %vm324, %v314, 0
      %v327 = vsel %vm324, %v315, 0
      %v329 = vsel %vm324, %v321, 0
      %v331 = vsel %vm324, %v323, 0
      %333 = vmatpush.xpose.msra.mxu0 0.0
      %334 = vmatpush.xpose.msra.mxu0 0.0
      %335 = vmatpush.xpose.msra.mxu0 0.0
      %336 = vmatpush.xpose.msra.mxu0 0.0
      %337 = vmatpush.xpose.msra.mxu0 0.0
      %338 = vmatpush.xpose.msra.mxu0 0.0
      %339 = vmatpush.xpose.msra.mxu0 0.0
      %340 = vmatpush.xpose.msra.mxu0 0.0
      %341 = vmatpush.xpose.msra.mxu0 0.0
      %342 = vmatpush.xpose.msra.mxu0 0.0
      %343 = vmatpush.xpose.msra.mxu0 0.0
      %344 = vmatpush.xpose.msra.mxu0 0.0
      %345 = vmatpush.xpose.msra.mxu0 0.0
      %346 = vmatpush.xpose.msra.mxu0 0.0
      %347 = vmatpush.xpose.msra.mxu0 %v331
      %348 = vmatpush.xpose.msra.mxu0 %v329
      %349 = vmatmul.f32.gmra.mxu0 %v325
      %v350 = vpop.f32.mrf.mxu0
      %v351 = vadd.f32 0.0, %v350
      %352 = vmatmul.f32.gmra.mxu0 %v327
      %v353 = vpop.f32.mrf.mxu0
      %v354 = vadd.f32 0.0, %v353
      %355 = vdwg.mxu0
      %358 = vrot.lane.b32.xlu0 %v316, 96
      %v359 = vpop.permute.xlu0 %358
      %360 = vrot.lane.b32.xlu0 %v317, 96
      %v361 = vpop.permute.xlu0 %360
      %v362 = vsel %vm324, %v316, 0
      %v364 = vsel %vm324, %v317, 0
      %v366 = vsel %vm324, %v359, 0
      %v368 = vsel %vm324, %v361, 0
      %370 = vmatpush.xpose.msra.mxu0 0.0
      %371 = vmatpush.xpose.msra.mxu0 0.0
      %372 = vmatpush.xpose.msra.mxu0 0.0
      %373 = vmatpush.xpose.msra.mxu0 0.0
      %374 = vmatpush.xpose.msra.mxu0 0.0
      %375 = vmatpush.xpose.msra.mxu0 0.0
      %376 = vmatpush.xpose.msra.mxu0 0.0
      %377 = vmatpush.xpose.msra.mxu0 0.0
      %378 = vmatpush.xpose.msra.mxu0 0.0
      %379 = vmatpush.xpose.msra.mxu0 0.0
      %380 = vmatpush.xpose.msra.mxu0 0.0
      %381 = vmatpush.xpose.msra.mxu0 0.0
      %382 = vmatpush.xpose.msra.mxu0 0.0
      %383 = vmatpush.xpose.msra.mxu0 0.0
      %384 = vmatpush.xpose.msra.mxu0 %v368
      %385 = vmatpush.xpose.msra.mxu0 %v366
      %386 = vmatmul.f32.gmra.mxu0 %v362
      %v387 = vpop.f32.mrf.mxu0
      %v388 = vadd.f32 0.0, %v387
      %389 = vmatmul.f32.gmra.mxu0 %v364
      %v390 = vpop.f32.mrf.mxu0
      %v391 = vadd.f32 0.0, %v390
      %392 = vdwg.mxu0
      %v393 = vmul.f32 %v351, 0.25
      %v394 = vmul.f32 %v354, 0.25
      %v395 = vmul.f32 %v388, 0.25
      %v396 = vmul.f32 %v391, 0.25
      %v397 = vld [vmem:[%s5] sm:$0xff]
      %v398 = vld [vmem:[%s5 + $0x8] sm:$0xff]
      %v399 = vadd.f32 %v393, %v397
      %v400 = vadd.f32 %v394, %v398
      %v401 = vadd.f32 %v395, %v397
      %v402 = vadd.f32 %v396, %v398
      %v403 = vsel %vm324, %v399, -inf
      %404 = vmax.xlane.f32.xlu0 %v403
      %v405 = vpop.xlane.xlu0 %404
      %v406 = vsel %vm324, %v400, -inf
      %407 = vmax.xlane.f32.xlu0 %v406
      %v408 = vpop.xlane.xlu0 %407
      %v409 = vsel %vm324, %v401, -inf
      %410 = vmax.xlane.f32.xlu0 %v409
      %v411 = vpop.xlane.xlu0 %410
      %v412 = vsel %vm324, %v402, -inf
      %413 = vmax.xlane.f32.xlu0 %v412
      %v414 = vpop.xlane.xlu0 %413
      %v415 = vsub.f32 %v399, %v405
      %v416 = vsub.f32 %v400, %v408
      %v417 = vsub.f32 %v401, %v411
      %v418 = vsub.f32 %v402, %v414
      %v419 = vmul.f32 %v415, 1.442695
      %v420 = vpow.pop %v419
      %v421 = vmul.f32 %v416, 1.442695
      %v422 = vpow.pop %v421
      %v423 = vmul.f32 %v417, 1.442695
      %v424 = vpow.pop %v423
      %v425 = vmul.f32 %v418, 1.442695
      %v426 = vpow.pop %v425
      %v427 = vsel %vm324, %v420, 0.0
      %428 = vadd.xlane.f32.xlu0 %v427
      %v429 = vpop.xlane.xlu0 %428
      %v430 = vsel %vm324, %v422, 0.0
      %431 = vadd.xlane.f32.xlu0 %v430
      %v432 = vpop.xlane.xlu0 %431
      %v433 = vsel %vm324, %v424, 0.0
      %434 = vadd.xlane.f32.xlu0 %v433
      %v435 = vpop.xlane.xlu0 %434
      %v436 = vsel %vm324, %v426, 0.0
      %437 = vadd.xlane.f32.xlu0 %v436
      %v438 = vpop.xlane.xlu0 %437
      %v439 = vrcp.pop %v429
      %v440 = vmul.f32 %v429, %v439
      %v441 = vsub.f32 1.0, %v440
      %v442 = vmul.f32 %v439, %v441
      %v443 = vadd.f32 %v439, %v442
      %vm444 = vweird.f32 %v429
      %vm445 = vweird.f32 %v439
      %vm446 = vmor %vm444, %vm445
      %v447 = vsel %vm446, %v439, %v443
      %v448 = vand.u32 2147483647, %v429
      %vm449 = vcmp.eq.f32.partialorder %v448, 8.507059e+37
      %v450 = vand.u32 %v429, 2147483648
      %v451 = vor.u32 1.1754944e-38, %v450
      %v452 = vsel %vm449, %v451, %v447
      %v453 = vrcp.pop %v432
      %v454 = vmul.f32 %v432, %v453
      %v455 = vsub.f32 1.0, %v454
      %v456 = vmul.f32 %v453, %v455
      %v457 = vadd.f32 %v453, %v456
      %vm458 = vweird.f32 %v432
      %vm459 = vweird.f32 %v453
      %vm460 = vmor %vm458, %vm459
      %v461 = vsel %vm460, %v453, %v457
      %v462 = vand.u32 2147483647, %v432
      %vm463 = vcmp.eq.f32.partialorder %v462, 8.507059e+37
      %v464 = vand.u32 %v432, 2147483648
      %v465 = vor.u32 1.1754944e-38, %v464
      %v466 = vsel %vm463, %v465, %v461
      %v467 = vrcp.pop %v435
      %v468 = vmul.f32 %v435, %v467
      %v469 = vsub.f32 1.0, %v468
      %v470 = vmul.f32 %v467, %v469
      %v471 = vadd.f32 %v467, %v470
      %vm472 = vweird.f32 %v435
      %vm473 = vweird.f32 %v467
      %vm474 = vmor %vm472, %vm473
      %v475 = vsel %vm474, %v467, %v471
      %v476 = vand.u32 2147483647, %v435
      %vm477 = vcmp.eq.f32.partialorder %v476, 8.507059e+37
      %v478 = vand.u32 %v435, 2147483648
      %v479 = vor.u32 1.1754944e-38, %v478
      %v480 = vsel %vm477, %v479, %v475
      %v481 = vrcp.pop %v438
      %v482 = vmul.f32 %v438, %v481
      %v483 = vsub.f32 1.0, %v482
      %v484 = vmul.f32 %v481, %v483
      %v485 = vadd.f32 %v481, %v484
      %vm486 = vweird.f32 %v438
      %vm487 = vweird.f32 %v481
      %vm488 = vmor %vm486, %vm487
      %v489 = vsel %vm488, %v481, %v485
      %v490 = vand.u32 2147483647, %v438
      %vm491 = vcmp.eq.f32.partialorder %v490, 8.507059e+37
      %v492 = vand.u32 %v438, 2147483648
      %v493 = vor.u32 1.1754944e-38, %v492
      %v494 = vsel %vm491, %v493, %v489
      %v495 = vmul.f32 %v420, %v452
      %v496 = vmul.f32 %v422, %v466
      %v497 = vmul.f32 %v424, %v480
      %v498 = vmul.f32 %v426, %v494
      %499 = vrot.lane.b32.xlu0 %v314, 64
      %v500 = vpop.permute.xlu0 %499
      %501 = vrot.lane.b32.xlu0 %v315, 64
      %v502 = vpop.permute.xlu0 %501
      %v506 = vsel %vm324, %v495, 0
      %v509 = vsel %vm324, %v496, 0
      %511 = vmatpush.msra.mxu0 0.0
      %512 = vmatpush.msra.mxu0 0.0
      %513 = vmatpush.msra.mxu0 0.0
      %514 = vmatpush.msra.mxu0 0.0
      %515 = vmatpush.msra.mxu0 0.0
      %516 = vmatpush.msra.mxu0 0.0
      %517 = vmatpush.msra.mxu0 0.0
      %518 = vmatpush.msra.mxu0 0.0
      %519 = vmatpush.msra.mxu0 0.0
      %520 = vmatpush.msra.mxu0 0.0
      %521 = vmatpush.msra.mxu0 0.0
      %522 = vmatpush.msra.mxu0 0.0
      %523 = vmatpush.msra.mxu0 0.0
      %524 = vmatpush.msra.mxu0 0.0
      %525 = vmatpush.msra.mxu0 %v502
      %526 = vmatpush.msra.mxu0 %v500
      %527 = vmatmul.f32.gmra.mxu0 %v506
      %v528 = vpop.f32.mrf.mxu0
      %v529 = vadd.f32 0.0, %v528
      %530 = vmatmul.f32.gmra.mxu0 %v509
      %v531 = vpop.f32.mrf.mxu0
      %v532 = vadd.f32 0.0, %v531
      %533 = vdwg.mxu0
      %534 = vrot.lane.b32.xlu0 %v316, 64
      %v535 = vpop.permute.xlu0 %534
      %536 = vrot.lane.b32.xlu0 %v317, 64
      %v537 = vpop.permute.xlu0 %536
      %v541 = vsel %vm324, %v497, 0
      %v544 = vsel %vm324, %v498, 0
      %546 = vmatpush.msra.mxu0 0.0
      %547 = vmatpush.msra.mxu0 0.0
      %548 = vmatpush.msra.mxu0 0.0
      %549 = vmatpush.msra.mxu0 0.0
      %550 = vmatpush.msra.mxu0 0.0
      %551 = vmatpush.msra.mxu0 0.0
      %552 = vmatpush.msra.mxu0 0.0
      %553 = vmatpush.msra.mxu0 0.0
      %554 = vmatpush.msra.mxu0 0.0
      %555 = vmatpush.msra.mxu0 0.0
      %556 = vmatpush.msra.mxu0 0.0
      %557 = vmatpush.msra.mxu0 0.0
      %558 = vmatpush.msra.mxu0 0.0
      %559 = vmatpush.msra.mxu0 0.0
      %560 = vmatpush.msra.mxu0 %v537
      %561 = vmatpush.msra.mxu0 %v535
      %562 = vmatmul.f32.gmra.mxu0 %v541
      %v563 = vpop.f32.mrf.mxu0
      %v564 = vadd.f32 0.0, %v563
      %565 = vmatmul.f32.gmra.mxu0 %v544
      %v566 = vpop.f32.mrf.mxu0
      %v567 = vadd.f32 0.0, %v566
      %568 = vdwg.mxu0
      %569 = vst.msk [vmem:[#allocation3] sm:$0xff] %vm324, %v529
      %570 = vst.msk [vmem:[#allocation3 + $0x8] sm:$0xff] %vm324, %v532
      %571 = vst.msk [vmem:[#allocation3 + $0x10] sm:$0xff] %vm324, %v564
      %572 = vst.msk [vmem:[#allocation3 + $0x18] sm:$0xff] %vm324, %v567
      %v573 = vld [vmem:[#allocation2] sm:$0xff]
      %v574 = vld [vmem:[#allocation2 + $0x8] sm:$0xff]
      %v575 = vld [vmem:[#allocation2 + $0x10] sm:$0xff]
      %v576 = vld [vmem:[#allocation2 + $0x18] sm:$0xff]
      %579 = vrot.lane.b32.xlu0 %v573, 112
      %v580 = vpop.permute.xlu0 %579
      %581 = vrot.lane.b32.xlu0 %v574, 112
      %v582 = vpop.permute.xlu0 %581
      %583 = vrot.lane.b32.xlu0 %v573, 80
      %v584 = vpop.permute.xlu0 %583
      %585 = vrot.lane.b32.xlu0 %v574, 80
      %v586 = vpop.permute.xlu0 %585
      %v587 = vsel %vm324, %v580, 0
      %v589 = vsel %vm324, %v582, 0
      %v591 = vsel %vm324, %v584, 0
      %v593 = vsel %vm324, %v586, 0
      %595 = vmatpush.xpose.msra.mxu0 0.0
      %596 = vmatpush.xpose.msra.mxu0 0.0
      %597 = vmatpush.xpose.msra.mxu0 0.0
      %598 = vmatpush.xpose.msra.mxu0 0.0
      %599 = vmatpush.xpose.msra.mxu0 0.0
      %600 = vmatpush.xpose.msra.mxu0 0.0
      %601 = vmatpush.xpose.msra.mxu0 0.0
      %602 = vmatpush.xpose.msra.mxu0 0.0
      %603 = vmatpush.xpose.msra.mxu0 0.0
      %604 = vmatpush.xpose.msra.mxu0 0.0
      %605 = vmatpush.xpose.msra.mxu0 0.0
      %606 = vmatpush.xpose.msra.mxu0 0.0
      %607 = vmatpush.xpose.msra.mxu0 0.0
      %608 = vmatpush.xpose.msra.mxu0 0.0
      %609 = vmatpush.xpose.msra.mxu0 %v593
      %610 = vmatpush.xpose.msra.mxu0 %v591
      %611 = vmatmul.f32.gmra.mxu0 %v587
      %v612 = vpop.f32.mrf.mxu0
      %v613 = vadd.f32 0.0, %v612
      %614 = vmatmul.f32.gmra.mxu0 %v589
      %v615 = vpop.f32.mrf.mxu0
      %v616 = vadd.f32 0.0, %v615
      %617 = vdwg.mxu0
      %620 = vrot.lane.b32.xlu0 %v575, 112
      %v621 = vpop.permute.xlu0 %620
      %622 = vrot.lane.b32.xlu0 %v576, 112
      %v623 = vpop.permute.xlu0 %622
      %624 = vrot.lane.b32.xlu0 %v575, 80
      %v625 = vpop.permute.xlu0 %624
      %626 = vrot.lane.b32.xlu0 %v576, 80
      %v627 = vpop.permute.xlu0 %626
      %v628 = vsel %vm324, %v621, 0
      %v630 = vsel %vm324, %v623, 0
      %v632 = vsel %vm324, %v625, 0
      %v634 = vsel %vm324, %v627, 0
      %636 = vmatpush.xpose.msra.mxu0 0.0
      %637 = vmatpush.xpose.msra.mxu0 0.0
      %638 = vmatpush.xpose.msra.mxu0 0.0
      %639 = vmatpush.xpose.msra.mxu0 0.0
      %640 = vmatpush.xpose.msra.mxu0 0.0
      %641 = vmatpush.xpose.msra.mxu0 0.0
      %642 = vmatpush.xpose.msra.mxu0 0.0
      %643 = vmatpush.xpose.msra.mxu0 0.0
      %644 = vmatpush.xpose.msra.mxu0 0.0
      %645 = vmatpush.xpose.msra.mxu0 0.0
      %646 = vmatpush.xpose.msra.mxu0 0.0
      %647 = vmatpush.xpose.msra.mxu0 0.0
      %648 = vmatpush.xpose.msra.mxu0 0.0
      %649 = vmatpush.xpose.msra.mxu0 0.0
      %650 = vmatpush.xpose.msra.mxu0 %v634
      %651 = vmatpush.xpose.msra.mxu0 %v632
      %652 = vmatmul.f32.gmra.mxu0 %v628
      %v653 = vpop.f32.mrf.mxu0
      %v654 = vadd.f32 0.0, %v653
      %655 = vmatmul.f32.gmra.mxu0 %v630
      %v656 = vpop.f32.mrf.mxu0
      %v657 = vadd.f32 0.0, %v656
      %658 = vdwg.mxu0
      %v659 = vmul.f32 %v613, 0.25
      %v660 = vmul.f32 %v616, 0.25
      %v661 = vmul.f32 %v654, 0.25
      %v662 = vmul.f32 %v657, 0.25
      %s663 = scalar_lea.vmem %s5, 16
      %v664 = vld [vmem:[%s663] sm:$0xff]
      %v665 = vld [vmem:[%s663 + $0x8] sm:$0xff]
      %v666 = vadd.f32 %v659, %v664
      %v667 = vadd.f32 %v660, %v665
      %v668 = vadd.f32 %v661, %v664
      %v669 = vadd.f32 %v662, %v665
      %v670 = vsel %vm324, %v666, -inf
      %671 = vmax.xlane.f32.xlu0 %v670
      %v672 = vpop.xlane.xlu0 %671
      %v673 = vsel %vm324, %v667, -inf
      %674 = vmax.xlane.f32.xlu0 %v673
      %v675 = vpop.xlane.xlu0 %674
      %v676 = vsel %vm324, %v668, -inf
      %677 = vmax.xlane.f32.xlu0 %v676
      %v678 = vpop.xlane.xlu0 %677
      %v679 = vsel %vm324, %v669, -inf
      %680 = vmax.xlane.f32.xlu0 %v679
      %v681 = vpop.xlane.xlu0 %680
      %v682 = vsub.f32 %v666, %v672
      %v683 = vsub.f32 %v667, %v675
      %v684 = vsub.f32 %v668, %v678
      %v685 = vsub.f32 %v669, %v681
      %v686 = vmul.f32 %v682, 1.442695
      %v687 = vpow.pop %v686
      %v688 = vmul.f32 %v683, 1.442695
      %v689 = vpow.pop %v688
      %v690 = vmul.f32 %v684, 1.442695
      %v691 = vpow.pop %v690
      %v692 = vmul.f32 %v685, 1.442695
      %v693 = vpow.pop %v692
      %v694 = vsel %vm324, %v687, 0.0
      %695 = vadd.xlane.f32.xlu0 %v694
      %v696 = vpop.xlane.xlu0 %695
      %v697 = vsel %vm324, %v689, 0.0
      %698 = vadd.xlane.f32.xlu0 %v697
      %v699 = vpop.xlane.xlu0 %698
      %v700 = vsel %vm324, %v691, 0.0
      %701 = vadd.xlane.f32.xlu0 %v700
      %v702 = vpop.xlane.xlu0 %701
      %v703 = vsel %vm324, %v693, 0.0
      %704 = vadd.xlane.f32.xlu0 %v703
      %v705 = vpop.xlane.xlu0 %704
      %v706 = vrcp.pop %v696
      %v707 = vmul.f32 %v696, %v706
      %v708 = vsub.f32 1.0, %v707
      %v709 = vmul.f32 %v706, %v708
      %v710 = vadd.f32 %v706, %v709
      %vm711 = vweird.f32 %v696
      %vm712 = vweird.f32 %v706
      %vm713 = vmor %vm711, %vm712
      %v714 = vsel %vm713, %v706, %v710
      %v715 = vand.u32 2147483647, %v696
      %vm716 = vcmp.eq.f32.partialorder %v715, 8.507059e+37
      %v717 = vand.u32 %v696, 2147483648
      %v718 = vor.u32 1.1754944e-38, %v717
      %v719 = vsel %vm716, %v718, %v714
      %v720 = vrcp.pop %v699
      %v721 = vmul.f32 %v699, %v720
      %v722 = vsub.f32 1.0, %v721
      %v723 = vmul.f32 %v720, %v722
      %v724 = vadd.f32 %v720, %v723
      %vm725 = vweird.f32 %v699
      %vm726 = vweird.f32 %v720
      %vm727 = vmor %vm725, %vm726
      %v728 = vsel %vm727, %v720, %v724
      %v729 = vand.u32 2147483647, %v699
      %vm730 = vcmp.eq.f32.partialorder %v729, 8.507059e+37
      %v731 = vand.u32 %v699, 2147483648
      %v732 = vor.u32 1.1754944e-38, %v731
      %v733 = vsel %vm730, %v732, %v728
      %v734 = vrcp.pop %v702
      %v735 = vmul.f32 %v702, %v734
      %v736 = vsub.f32 1.0, %v735
      %v737 = vmul.f32 %v734, %v736
      %v738 = vadd.f32 %v734, %v737
      %vm739 = vweird.f32 %v702
      %vm740 = vweird.f32 %v734
      %vm741 = vmor %vm739, %vm740
      %v742 = vsel %vm741, %v734, %v738
      %v743 = vand.u32 2147483647, %v702
      %vm744 = vcmp.eq.f32.partialorder %v743, 8.507059e+37
      %v745 = vand.u32 %v702, 2147483648
      %v746 = vor.u32 1.1754944e-38, %v745
      %v747 = vsel %vm744, %v746, %v742
      %v748 = vrcp.pop %v705
      %v749 = vmul.f32 %v705, %v748
      %v750 = vsub.f32 1.0, %v749
      %v751 = vmul.f32 %v748, %v750
      %v752 = vadd.f32 %v748, %v751
      %vm753 = vweird.f32 %v705
      %vm754 = vweird.f32 %v748
      %vm755 = vmor %vm753, %vm754
      %v756 = vsel %vm755, %v748, %v752
      %v757 = vand.u32 2147483647, %v705
      %vm758 = vcmp.eq.f32.partialorder %v757, 8.507059e+37
      %v759 = vand.u32 %v705, 2147483648
      %v760 = vor.u32 1.1754944e-38, %v759
      %v761 = vsel %vm758, %v760, %v756
      %v762 = vmul.f32 %v687, %v719
      %v763 = vmul.f32 %v689, %v733
      %v764 = vmul.f32 %v691, %v747
      %v765 = vmul.f32 %v693, %v761
      %766 = vrot.lane.b32.xlu0 %v573, 48
      %v767 = vpop.permute.xlu0 %766
      %768 = vrot.lane.b32.xlu0 %v574, 48
      %v769 = vpop.permute.xlu0 %768
      %v773 = vsel %vm324, %v762, 0
      %v776 = vsel %vm324, %v763, 0
      %778 = vmatpush.msra.mxu0 0.0
      %779 = vmatpush.msra.mxu0 0.0
      %780 = vmatpush.msra.mxu0 0.0
      %781 = vmatpush.msra.mxu0 0.0
      %782 = vmatpush.msra.mxu0 0.0
      %783 = vmatpush.msra.mxu0 0.0
      %784 = vmatpush.msra.mxu0 0.0
      %785 = vmatpush.msra.mxu0 0.0
      %786 = vmatpush.msra.mxu0 0.0
      %787 = vmatpush.msra.mxu0 0.0
      %788 = vmatpush.msra.mxu0 0.0
      %789 = vmatpush.msra.mxu0 0.0
      %790 = vmatpush.msra.mxu0 0.0
      %791 = vmatpush.msra.mxu0 0.0
      %792 = vmatpush.msra.mxu0 %v769
      %793 = vmatpush.msra.mxu0 %v767
      %794 = vmatmul.f32.gmra.mxu0 %v773
      %v795 = vpop.f32.mrf.mxu0
      %v796 = vadd.f32 0.0, %v795
      %797 = vmatmul.f32.gmra.mxu0 %v776
      %v798 = vpop.f32.mrf.mxu0
      %v799 = vadd.f32 0.0, %v798
      %800 = vdwg.mxu0
      %801 = vrot.lane.b32.xlu0 %v575, 48
      %v802 = vpop.permute.xlu0 %801
      %803 = vrot.lane.b32.xlu0 %v576, 48
      %v804 = vpop.permute.xlu0 %803
      %v808 = vsel %vm324, %v764, 0
      %v811 = vsel %vm324, %v765, 0
      %813 = vmatpush.msra.mxu0 0.0
      %814 = vmatpush.msra.mxu0 0.0
      %815 = vmatpush.msra.mxu0 0.0
      %816 = vmatpush.msra.mxu0 0.0
      %817 = vmatpush.msra.mxu0 0.0
      %818 = vmatpush.msra.mxu0 0.0
      %819 = vmatpush.msra.mxu0 0.0
      %820 = vmatpush.msra.mxu0 0.0
      %821 = vmatpush.msra.mxu0 0.0
      %822 = vmatpush.msra.mxu0 0.0
      %823 = vmatpush.msra.mxu0 0.0
      %824 = vmatpush.msra.mxu0 0.0
      %825 = vmatpush.msra.mxu0 0.0
      %826 = vmatpush.msra.mxu0 0.0
      %827 = vmatpush.msra.mxu0 %v804
      %828 = vmatpush.msra.mxu0 %v802
      %829 = vmatmul.f32.gmra.mxu0 %v808
      %v830 = vpop.f32.mrf.mxu0
      %v831 = vadd.f32 0.0, %v830
      %832 = vmatmul.f32.gmra.mxu0 %v811
      %v833 = vpop.f32.mrf.mxu0
      %v834 = vadd.f32 0.0, %v833
      %835 = vdwg.mxu0
      %840 = vrot.lane.b32.xlu0 %v796, 16
      %v841 = vpop.permute.xlu0 %840
      %842 = vrot.lane.b32.xlu0 %v799, 16
      %v843 = vpop.permute.xlu0 %842
      %844 = vrot.lane.b32.xlu0 %v831, 16
      %v845 = vpop.permute.xlu0 %844
      %846 = vrot.lane.b32.xlu0 %v834, 16
      %v847 = vpop.permute.xlu0 %846
      %vm852 = vcmask 261248
      %853 = vst.msk [vmem:[#allocation3] sm:$0xff] %vm852, %v841
      %854 = vst.msk [vmem:[#allocation3 + $0x8] sm:$0xff] %vm852, %v843
      %855 = vst.msk [vmem:[#allocation3 + $0x10] sm:$0xff] %vm852, %v845
      %856 = vst.msk [vmem:[#allocation3 + $0x18] sm:$0xff] %vm852, %v847
      %v857 = vld [vmem:[#allocation3] sm:$0xff]
      %v858 = vld [vmem:[#allocation3 + $0x8] sm:$0xff]
      %v859 = vld [vmem:[#allocation3 + $0x10] sm:$0xff]
      %v860 = vld [vmem:[#allocation3 + $0x18] sm:$0xff]
      %v861 = vld [vmem:[%s3] sm:$0xff]
      %v862 = vld [vmem:[%s3 + $0x8] sm:$0xff]
      %v863 = vld [vmem:[%s3 + $0x10] sm:$0xff]
      %v864 = vld [vmem:[%s3 + $0x18] sm:$0xff]
      %v865 = vld [vmem:[%s4] sm:$0x1]
      %v867 = vperm.slane %v865, 0
      %v870 = vsel %vm267, %v857, 0
      %v873 = vsel %vm267, %v858, 0
      %v876 = vsel %vm267, %v859, 0
      %v879 = vsel %vm267, %v860, 0
      %881 = vmatpush.msra.mxu0 0.0
      %882 = vmatpush.msra.mxu0 0.0
      %883 = vmatpush.msra.mxu0 0.0
      %884 = vmatpush.msra.mxu0 0.0
      %885 = vmatpush.msra.mxu0 0.0
      %886 = vmatpush.msra.mxu0 0.0
      %887 = vmatpush.msra.mxu0 0.0
      %888 = vmatpush.msra.mxu0 0.0
      %889 = vmatpush.msra.mxu0 0.0
      %890 = vmatpush.msra.mxu0 0.0
      %891 = vmatpush.msra.mxu0 0.0
      %892 = vmatpush.msra.mxu0 0.0
      %893 = vmatpush.msra.mxu0 %v864
      %894 = vmatpush.msra.mxu0 %v863
      %895 = vmatpush.msra.mxu0 %v862
      %896 = vmatpush.msra.mxu0 %v861
      %897 = vmatmul.f32.gmra.mxu0 %v870
      %v898 = vpop.f32.mrf.mxu0
      %v899 = vadd.f32 %v867, %v898
      %900 = vmatmul.f32.gmra.mxu0 %v873
      %v901 = vpop.f32.mrf.mxu0
      %v902 = vadd.f32 %v867, %v901
      %903 = vmatmul.f32.gmra.mxu0 %v876
      %v904 = vpop.f32.mrf.mxu0
      %v905 = vadd.f32 %v867, %v904
      %906 = vmatmul.f32.gmra.mxu0 %v879
      %v907 = vpop.f32.mrf.mxu0
      %v908 = vadd.f32 %v867, %v907
      %909 = vdwg.mxu0
      %910 = vst.msk [vmem:[%s253] sm:$0xff] %vm267, %v899
      %911 = vst.msk [vmem:[%s253 + $0x8] sm:$0xff] %vm267, %v902
      %912 = vst.msk [vmem:[%s253 + $0x10] sm:$0xff] %vm267, %v905
      %913 = vst.msk [vmem:[%s253 + $0x18] sm:$0xff] %vm267, %v908
      %s914 = smul.u32 4, %s17
      %p915 = scmp.lt.s32.totalorder %s914, 7
      %s916 = scalar_select %p915, %s914, 7
      %s917 = smul.addr %s916, 8
      %s918 = scalar_lea.vmem %s6, %s917
      // Predicated region
      $region45: #{tpu_custom_call.1} parent=43 // pred_check
        %p919 = pneg %p166
      $region46: #{tpu_custom_call.1} parent=43 // pred_check_branch
        %921 = sbr.rel (%p919) target = $region48
      $region47: #{tpu_custom_call.1} parent=43 // pred_region
        %s922 = smul.u32 4, %s17
      $region48: #{tpu_custom_call.1} parent=43 // pred_fallthru
        _
    $region44: #{tpu_custom_call.1} parent=5 // pred_fallthru
      _
    %p923 = scmp.le.s32.totalorder 2, %s12
    // Predicated region
    $region49: #{tpu_custom_call.1} parent=5 // pred_check
      %p924 = pneg %p923
    $region50: #{tpu_custom_call.1} parent=5 // pred_check_branch
      %926 = sbr.rel (%p924) target = $region52
    $region51: #{tpu_custom_call.1} parent=5 // pred_region
      %s927 = ssub.s32 %s12, 2
      // Predicated region
      $region53: #{tpu_custom_call.1} parent=51 // pred_check
        %p928 = pneg %p172
      $region54: #{tpu_custom_call.1} parent=51 // pred_check_branch
        %930 = sbr.rel (%p928) target = $region56
      $region55: #{tpu_custom_call.1} parent=51 // pred_region
        %s931 = smul.u32 4, %s18
        %p932 = scmp.lt.s32.totalorder %s931, 7
        %s933 = scalar_select %p932, %s931, 7
        %s934 = smul.addr %s933, 8
        %s935 = scalar_lea.vmem %s6, %s934
      $region56: #{tpu_custom_call.1} parent=51 // pred_fallthru
        _
    $region52: #{tpu_custom_call.1} parent=5 // pred_fallthru
      _
  $region6: #{tpu_custom_call.1} parent=0 // loop_footer
    %s16 = sadd.s32 1, %s12
  $region7: #{tpu_custom_call.1} parent=0 // loop_footer_branch
    %11 = sbr.rel target = $region3
  $region8: #{tpu_custom_call.1} parent=0 // loop_exit
    _

</llo_original>
